<compile_context>
chip_gen: v7x
topology: tpu7x:2x2x1
jax: 0.10.0
libtpu: 0.0.40
codegen_flags: <defaults>
</compile_context>

<pallas_src>
import functools
import math

import jax
import jax.numpy as jnp
from jax import lax
from jax.experimental import pallas as pl
from jax.experimental.pallas import tpu as pltpu


# -----------------------------------------------------------------------------
# Fused kernel: per (batch, q-tile) — projections + attention + output linear
# -----------------------------------------------------------------------------
def _fused_mha_kernel(xq_ref, xk_ref, xv_ref,
                      wq_ref, bq_ref, wk_ref, bk_ref, wv_ref, bv_ref,
                      wo_ref, bo_ref,
                      o_ref,
                      kproj_ref, vproj_ref, ctx_ref,
                      *, n_head, d_head):
    # xq_ref           : (1, TQ, d_model)  bf16
    # xk_ref / xv_ref  : (1, S,  d_model)  bf16  (q-invariant -> resident)
    # wq/wk/wv_ref     : (d_model, H*Dh)   bf16  (attention scale pre-folded into wq/bq)
    # bq/bk/bv_ref     : (1, H*Dh)         f32
    # wo_ref           : (H*Dh, d_model)   bf16
    # bo_ref           : (1, d_model)      f32
    # o_ref            : (1, TQ, d_model)  f32
    # kproj/vproj_ref  : (H, S, Dh) bf16 VMEM scratch, head-major, persists across q tiles
    # ctx_ref          : (TQ, H*Dh) bf16 VMEM scratch (per-tile context, pre-output-proj)
    qi = pl.program_id(1)

    # K / V projections: one wide bf16 MXU matmul each, once per batch (first q tile
    # only).  The head-major relayout is paid once per batch here, not per q tile.
    @pl.when(qi == 0)
    def _():
        kp = (jnp.dot(xk_ref[0], wk_ref[...], preferred_element_type=jnp.float32)
              + bk_ref[...])
        vp = (jnp.dot(xv_ref[0], wv_ref[...], preferred_element_type=jnp.float32)
              + bv_ref[...])
        for h in range(n_head):
            sl = slice(h * d_head, (h + 1) * d_head)
            kproj_ref[h] = kp[:, sl].astype(kproj_ref.dtype)
            vproj_ref[h] = vp[:, sl].astype(vproj_ref.dtype)

    # Q projection for this q tile (scale already folded into wq / bq).
    qp = (jnp.dot(xq_ref[0], wq_ref[...], preferred_element_type=jnp.float32)
          + bq_ref[...])
    qp = qp.astype(jnp.bfloat16)                      # (TQ, H*Dh)

    # Per-head attention.  Static unroll; per-head working set kept small by slicing the
    # head-major scratch refs (leading-axis index, no lane relayout) instead of holding
    # full K/V/Wo values live across the unrolled loop.
    for h in range(n_head):
        sl = slice(h * d_head, (h + 1) * d_head)
        qh = qp[:, sl]                                # (TQ, Dh) bf16
        kh = kproj_ref[h]                             # (S,  Dh) bf16
        vh = vproj_ref[h]                             # (S,  Dh) bf16

        # scores = qh @ kh^T, contracting last dims (no explicit transpose of K).
        scores = lax.dot_general(qh, kh, (((1,), (1,)), ((), ())),
                                 preferred_element_type=jnp.float32)   # (TQ, S) f32

        m = jnp.max(scores, axis=-1, keepdims=True)
        e = jnp.exp(scores - m)                       # f32 elementwise (v5e-safe)
        denom = jnp.sum(e, axis=-1, keepdims=True)

        # Deferred normalization: normalize the (TQ, Dh) context, not the (TQ, S) probs.
        ctx = jnp.dot(e.astype(jnp.bfloat16), vh,
                      preferred_element_type=jnp.float32)              # (TQ, Dh) f32
        ctx = ctx * pl.reciprocal(denom, approx=True)

        ctx_ref[:, sl] = ctx.astype(ctx_ref.dtype)

    # Single full-depth output projection: (TQ, H*Dh) @ (H*Dh, d_model).
    out = (jnp.dot(ctx_ref[...], wo_ref[...], preferred_element_type=jnp.float32)
           + bo_ref[...])
    o_ref[0] = out.astype(o_ref.dtype)


# -----------------------------------------------------------------------------
# Tiling / VMEM planning
# -----------------------------------------------------------------------------
def _plan_q_tiles(s, max_tile=512):
    """Return (q_tile, padded_q_len).

    Small S -> single full-extent tile (always BlockSpec-legal).  Large S -> a
    128-aligned tile; if S is not divisible, the QUERY axis is padded (keys are never
    padded, so softmax semantics are unchanged) and the output is sliced back.
    """
    if s <= max_tile:
        return s, s
    for t in (max_tile, 256, 128):
        if s % t == 0:
            return t, s
    t = 128
    return t, pl.cdiv(s, t) * t


def _estimate_vmem_bytes(tq, s_kv, d_model, hd):
    bf16, f32 = 2, 4
    db = 2  # double buffering of pipelined blocks
    n = 0
    n += db * tq * d_model * bf16                      # xq blocks
    n += db * 2 * s_kv * d_model * bf16                # xk, xv blocks
    n += db * 3 * (d_model * hd * bf16 + hd * f32)     # wq/wk/wv + bq/bk/bv
    n += db * (hd * d_model * bf16 + d_model * f32)    # wo + bo
    n += db * tq * d_model * f32                       # output blocks
    n += 2 * s_kv * hd * bf16                          # kproj/vproj scratch
    n += tq * hd * bf16                                # ctx scratch
    n += 6 * tq * s_kv * f32                           # scores/exp temps + slack
    n += 4 * tq * max(hd, d_model) * f32               # misc temps
    return n


# -----------------------------------------------------------------------------
# Wrapper
# -----------------------------------------------------------------------------
def multi_head_attention(Q, K, V, params, *, n_head, d_head, max_q_tile=512):
    """Q, K, V: (B, S, d_model) float32.  Returns (B, S_q, d_model) float32."""
    B, S_q, d_model = Q.shape
    S_kv = K.shape[1]
    hd = n_head * d_head
    scale = 1.0 / math.sqrt(d_head)

    # Fold the 1/sqrt(d_head) scale into the Q projection at trace time; cast all MXU
    # operands to bf16 at the boundary (biases stay f32, added to f32 accumulators).
    wq = (params["wq"] * scale).astype(jnp.bfloat16)
    bq = (params["bq"] * scale).astype(jnp.float32)
    wk = params["wk"].astype(jnp.bfloat16)
    bk = params["bk"].astype(jnp.float32)
    wv = params["wv"].astype(jnp.bfloat16)
    bv = params["bv"].astype(jnp.float32)
    wo = params["wo"].astype(jnp.bfloat16)
    bo = params["bo"].astype(jnp.float32)

    Qb = Q.astype(jnp.bfloat16)
    Kb = K.astype(jnp.bfloat16)
    Vb = V.astype(jnp.bfloat16)

    tq, sq_pad = _plan_q_tiles(S_q, max_q_tile)
    if sq_pad != S_q:
        # Pad ONLY the query axis; padded query rows compute garbage that is sliced off.
        Qb = jnp.pad(Qb, ((0, 0), (0, sq_pad - S_q), (0, 0)))

    grid = (B, sq_pad // tq)
    kernel = functools.partial(_fused_mha_kernel, n_head=n_head, d_head=d_head)

    xq_spec = pl.BlockSpec((1, tq, d_model), lambda b, i: (b, i, 0))
    xkv_spec = pl.BlockSpec((1, S_kv, d_model), lambda b, i: (b, 0, 0))   # q-invariant
    w_spec = pl.BlockSpec((d_model, hd), lambda b, i: (0, 0))             # grid-invariant
    bias_spec = pl.BlockSpec((1, hd), lambda b, i: (0, 0))
    wo_spec = pl.BlockSpec((hd, d_model), lambda b, i: (0, 0))
    bo_spec = pl.BlockSpec((1, d_model), lambda b, i: (0, 0))

    vmem_limit = int(min(max(32 * 1024 * 1024,
                             1.25 * _estimate_vmem_bytes(tq, S_kv, d_model, hd)),
                         56 * 1024 * 1024))   # v7x-safe cap (64 MiB physical)

    out = pl.pallas_call(
        kernel,
        out_shape=jax.ShapeDtypeStruct((B, sq_pad, d_model), jnp.float32),
        grid_spec=pltpu.PrefetchScalarGridSpec(
            num_scalar_prefetch=0,
            grid=grid,
            in_specs=[xq_spec, xkv_spec, xkv_spec,
                      w_spec, bias_spec, w_spec, bias_spec, w_spec, bias_spec,
                      wo_spec, bo_spec],
            out_specs=pl.BlockSpec((1, tq, d_model), lambda b, i: (b, i, 0)),
            scratch_shapes=[pltpu.VMEM((n_head, S_kv, d_head), jnp.bfloat16),  # kproj
                            pltpu.VMEM((n_head, S_kv, d_head), jnp.bfloat16),  # vproj
                            pltpu.VMEM((tq, hd), jnp.bfloat16)],               # ctx
        ),
        compiler_params=pltpu.CompilerParams(
            # q axis MUST stay innermost and "arbitrary": the per-batch K/V projection
            # scratch written at qi == 0 is carried across q tiles of the same batch.
            dimension_semantics=("parallel", "arbitrary"),
            vmem_limit_bytes=vmem_limit,
        ),
    )(Qb, Kb, Vb, wq, bq, wk, bk, wv, bv, wo, bo)

    if sq_pad != S_q:
        out = out[:, :S_q, :]
    return out


# -----------------------------------------------------------------------------
# Pure-JAX reference (matches the PyTorch module in eval mode, f32 throughout)
# -----------------------------------------------------------------------------
def reference_mha(Q, K, V, params, *, n_head, d_head):
    B, S, d_model = Q.shape
    scale = 1.0 / math.sqrt(d_head)
    q = Q @ params["wq"] + params["bq"]        # (B, S, H*Dh)
    k = K @ params["wk"] + params["bk"]
    v = V @ params["wv"] + params["bv"]

    def split(x):
        return x.reshape(B, S, n_head, d_head).transpose(0, 2, 1, 3)   # (B, H, S, Dh)

    qh, kh, vh = split(q), split(k), split(v)
    scores = jnp.einsum("bhqe,bhke->bhqk", qh, kh) * scale
    probs = jax.nn.softmax(scores, axis=-1)
    ctx = jnp.einsum("bhqk,bhke->bhqe", probs, vh)
    ctx = ctx.transpose(0, 2, 1, 3).reshape(B, S, n_head * d_head)
    return ctx @ params["wo"] + params["bo"]


# -----------------------------------------------------------------------------
if __name__ == "__main__":
    # Small shapes consistent with the module.
    B, S = 2, 8
    d_model, n_head, d_head = 32, 4, 8
    hd = n_head * d_head

    key = jax.random.PRNGKey(0)
    keys = jax.random.split(key, 11)

    def uniform_init(k, shape, fan_in):
        bound = 1.0 / math.sqrt(fan_in)
        return jax.random.uniform(k, shape, jnp.float32, -bound, bound)

    # Same parameterization as nn.Linear (weights stored transposed: x @ W + b).
    params = {
        "wq": uniform_init(keys[0], (d_model, hd), d_model),
        "bq": uniform_init(keys[1], (1, hd), d_model),
        "wk": uniform_init(keys[2], (d_model, hd), d_model),
        "bk": uniform_init(keys[3], (1, hd), d_model),
        "wv": uniform_init(keys[4], (d_model, hd), d_model),
        "bv": uniform_init(keys[5], (1, hd), d_model),
        "wo": uniform_init(keys[6], (hd, d_model), hd),
        "bo": uniform_init(keys[7], (1, d_model), hd),
    }

    Q = jax.random.normal(keys[8], (B, S, d_model), jnp.float32)
    K = jax.random.normal(keys[9], (B, S, d_model), jnp.float32)
    V = jax.random.normal(keys[10], (B, S, d_model), jnp.float32)

    out = multi_head_attention(Q, K, V, params, n_head=n_head, d_head=d_head)
    out = jax.block_until_ready(out)

    ref = reference_mha(Q, K, V, params, n_head=n_head, d_head=d_head)
    assert out.shape == (B, S, d_model)
    # Tolerance accounts for bf16 MXU operands / bf16 scratch (f32 accumulation kept)
    # plus the EUP approximate reciprocal on the softmax denominator.
    assert jnp.allclose(out, ref, atol=2e-2, rtol=2e-2), "mismatch vs reference"

    print("KERNEL_OK")
</pallas_src>

<mosaic_0001>
module attributes {stable_mosaic.version = 11 : i64} {
  func.func @_fused_mha_kernel(%arg0: i32, %arg1: i32, %arg2: memref<1x8x32xbf16, #tpu.memory_space<vmem>>, %arg3: memref<1x8x32xbf16, #tpu.memory_space<vmem>>, %arg4: memref<1x8x32xbf16, #tpu.memory_space<vmem>>, %arg5: memref<32x32xbf16, #tpu.memory_space<vmem>>, %arg6: memref<1x32xf32, #tpu.memory_space<vmem>>, %arg7: memref<32x32xbf16, #tpu.memory_space<vmem>>, %arg8: memref<1x32xf32, #tpu.memory_space<vmem>>, %arg9: memref<32x32xbf16, #tpu.memory_space<vmem>>, %arg10: memref<1x32xf32, #tpu.memory_space<vmem>>, %arg11: memref<32x32xbf16, #tpu.memory_space<vmem>>, %arg12: memref<1x32xf32, #tpu.memory_space<vmem>>, %arg13: memref<1x8x32xf32, #tpu.memory_space<vmem>>, %arg14: memref<4x8x8xbf16, #tpu.memory_space<vmem>>, %arg15: memref<4x8x8xbf16, #tpu.memory_space<vmem>>, %arg16: memref<8x32xbf16, #tpu.memory_space<vmem>>) attributes {dimension_semantics = [#tpu.dimension_semantics<parallel>, #tpu.dimension_semantics<arbitrary>], iteration_bounds = array<i64: 2, 1>, scalar_prefetch = 0 : i64, scratch_operands = 3 : i64, tpu.core_type = #tpu.core_type<tc>, window_params = [{transform_indices = @transform_0, window_bounds = array<i64: 1, 8, 32>}, {transform_indices = @transform_1, window_bounds = array<i64: 1, 8, 32>}, {transform_indices = @transform_2, window_bounds = array<i64: 1, 8, 32>}, {pipeline_mode = #tpu.pipeline_mode<synchronous>, transform_indices = @transform_3, window_bounds = array<i64: 32, 32>}, {pipeline_mode = #tpu.pipeline_mode<synchronous>, transform_indices = @transform_4, window_bounds = array<i64: 1, 32>}, {pipeline_mode = #tpu.pipeline_mode<synchronous>, transform_indices = @transform_5, window_bounds = array<i64: 32, 32>}, {pipeline_mode = #tpu.pipeline_mode<synchronous>, transform_indices = @transform_6, window_bounds = array<i64: 1, 32>}, {pipeline_mode = #tpu.pipeline_mode<synchronous>, transform_indices = @transform_7, window_bounds = array<i64: 32, 32>}, {pipeline_mode = #tpu.pipeline_mode<synchronous>, transform_indices = @transform_8, window_bounds = array<i64: 1, 32>}, {pipeline_mode = #tpu.pipeline_mode<synchronous>, transform_indices = @transform_9, window_bounds = array<i64: 32, 32>}, {pipeline_mode = #tpu.pipeline_mode<synchronous>, transform_indices = @transform_10, window_bounds = array<i64: 1, 32>}, {transform_indices = @transform_11, window_bounds = array<i64: 1, 8, 32>}]} {
    %c0_i32 = arith.constant 0 : i32
    %0 = arith.cmpi eq, %arg1, %c0_i32 : i32
    %1 = arith.extui %0 : i1 to i32
    %c0_i32_0 = arith.constant 0 : i32
    %2 = arith.cmpi ne, %1, %c0_i32_0 : i32
    scf.if %2 {
      %c0_59 = arith.constant 0 : index
      %c0_60 = arith.constant 0 : index
      %c0_61 = arith.constant 0 : index
      %100 = vector.load %arg3[%c0_59, %c0_60, %c0_61] : memref<1x8x32xbf16, #tpu.memory_space<vmem>>, vector<1x8x32xbf16>
      %101 = vector.shape_cast %100 : vector<1x8x32xbf16> to vector<8x32xbf16>
      %c0_62 = arith.constant 0 : index
      %c0_63 = arith.constant 0 : index
      %102 = vector.load %arg7[%c0_62, %c0_63] : memref<32x32xbf16, #tpu.memory_space<vmem>>, vector<32x32xbf16>
      %cst_64 = arith.constant dense<0.000000e+00> : vector<8x32xf32>
      %103 = tpu.matmul %101, %102, %cst_64 {dimension_numbers = #tpu.dot_dimension_numbers<[1], [0], [0], [1], [0, 0, 1, 1], [], []>} : vector<8x32xbf16>, vector<32x32xbf16>, vector<8x32xf32> -> vector<8x32xf32>
      %c0_65 = arith.constant 0 : index
      %c0_66 = arith.constant 0 : index
      %104 = vector.load %arg8[%c0_65, %c0_66] : memref<1x32xf32, #tpu.memory_space<vmem>>, vector<1x32xf32>
      %105 = vector.broadcast %104 : vector<1x32xf32> to vector<8x32xf32>
      %106 = arith.addf %103, %105 : vector<8x32xf32>
      %c0_67 = arith.constant 0 : index
      %c0_68 = arith.constant 0 : index
      %c0_69 = arith.constant 0 : index
      %107 = vector.load %arg4[%c0_67, %c0_68, %c0_69] : memref<1x8x32xbf16, #tpu.memory_space<vmem>>, vector<1x8x32xbf16>
      %108 = vector.shape_cast %107 : vector<1x8x32xbf16> to vector<8x32xbf16>
      %c0_70 = arith.constant 0 : index
      %c0_71 = arith.constant 0 : index
      %109 = vector.load %arg9[%c0_70, %c0_71] : memref<32x32xbf16, #tpu.memory_space<vmem>>, vector<32x32xbf16>
      %cst_72 = arith.constant dense<0.000000e+00> : vector<8x32xf32>
      %110 = tpu.matmul %108, %109, %cst_72 {dimension_numbers = #tpu.dot_dimension_numbers<[1], [0], [0], [1], [0, 0, 1, 1], [], []>} : vector<8x32xbf16>, vector<32x32xbf16>, vector<8x32xf32> -> vector<8x32xf32>
      %c0_73 = arith.constant 0 : index
      %c0_74 = arith.constant 0 : index
      %111 = vector.load %arg10[%c0_73, %c0_74] : memref<1x32xf32, #tpu.memory_space<vmem>>, vector<1x32xf32>
      %112 = vector.broadcast %111 : vector<1x32xf32> to vector<8x32xf32>
      %113 = arith.addf %110, %112 : vector<8x32xf32>
      %114 = vector.extract_strided_slice %106 {offsets = [0, 0], sizes = [8, 8], strides = [1, 1]} : vector<8x32xf32> to vector<8x8xf32>
      %115 = arith.truncf %114 : vector<8x8xf32> to vector<8x8xbf16>
      %c0_75 = arith.constant 0 : index
      %c0_76 = arith.constant 0 : index
      %c0_77 = arith.constant 0 : index
      %116 = vector.load %arg14[%c0_75, %c0_76, %c0_77] : memref<4x8x8xbf16, #tpu.memory_space<vmem>>, vector<1x8x8xbf16>
      %117 = vector.shape_cast %116 : vector<1x8x8xbf16> to vector<8x8xbf16>
      %118 = vector.shape_cast %115 : vector<8x8xbf16> to vector<1x8x8xbf16>
      tpu.vector_store %arg14[%c0_75, %c0_76, %c0_77], %118 {strides = array<i32>} : memref<4x8x8xbf16, #tpu.memory_space<vmem>>, vector<1x8x8xbf16>,
      %119 = vector.extract_strided_slice %113 {offsets = [0, 0], sizes = [8, 8], strides = [1, 1]} : vector<8x32xf32> to vector<8x8xf32>
      %120 = arith.truncf %119 : vector<8x8xf32> to vector<8x8xbf16>
      %c0_78 = arith.constant 0 : index
      %c0_79 = arith.constant 0 : index
      %c0_80 = arith.constant 0 : index
      %121 = vector.load %arg15[%c0_78, %c0_79, %c0_80] : memref<4x8x8xbf16, #tpu.memory_space<vmem>>, vector<1x8x8xbf16>
      %122 = vector.shape_cast %121 : vector<1x8x8xbf16> to vector<8x8xbf16>
      %123 = vector.shape_cast %120 : vector<8x8xbf16> to vector<1x8x8xbf16>
      tpu.vector_store %arg15[%c0_78, %c0_79, %c0_80], %123 {strides = array<i32>} : memref<4x8x8xbf16, #tpu.memory_space<vmem>>, vector<1x8x8xbf16>,
      %124 = vector.extract_strided_slice %106 {offsets = [0, 8], sizes = [8, 8], strides = [1, 1]} : vector<8x32xf32> to vector<8x8xf32>
      %125 = arith.truncf %124 : vector<8x8xf32> to vector<8x8xbf16>
      %c1_81 = arith.constant 1 : index
      %c0_82 = arith.constant 0 : index
      %c0_83 = arith.constant 0 : index
      %126 = vector.load %arg14[%c1_81, %c0_82, %c0_83] : memref<4x8x8xbf16, #tpu.memory_space<vmem>>, vector<1x8x8xbf16>
      %127 = vector.shape_cast %126 : vector<1x8x8xbf16> to vector<8x8xbf16>
      %128 = vector.shape_cast %125 : vector<8x8xbf16> to vector<1x8x8xbf16>
      tpu.vector_store %arg14[%c1_81, %c0_82, %c0_83], %128 {strides = array<i32>} : memref<4x8x8xbf16, #tpu.memory_space<vmem>>, vector<1x8x8xbf16>,
      %129 = vector.extract_strided_slice %113 {offsets = [0, 8], sizes = [8, 8], strides = [1, 1]} : vector<8x32xf32> to vector<8x8xf32>
      %130 = arith.truncf %129 : vector<8x8xf32> to vector<8x8xbf16>
      %c1_84 = arith.constant 1 : index
      %c0_85 = arith.constant 0 : index
      %c0_86 = arith.constant 0 : index
      %131 = vector.load %arg15[%c1_84, %c0_85, %c0_86] : memref<4x8x8xbf16, #tpu.memory_space<vmem>>, vector<1x8x8xbf16>
      %132 = vector.shape_cast %131 : vector<1x8x8xbf16> to vector<8x8xbf16>
      %133 = vector.shape_cast %130 : vector<8x8xbf16> to vector<1x8x8xbf16>
      tpu.vector_store %arg15[%c1_84, %c0_85, %c0_86], %133 {strides = array<i32>} : memref<4x8x8xbf16, #tpu.memory_space<vmem>>, vector<1x8x8xbf16>,
      %134 = vector.extract_strided_slice %106 {offsets = [0, 16], sizes = [8, 8], strides = [1, 1]} : vector<8x32xf32> to vector<8x8xf32>
      %135 = arith.truncf %134 : vector<8x8xf32> to vector<8x8xbf16>
      %c2_87 = arith.constant 2 : index
      %c0_88 = arith.constant 0 : index
      %c0_89 = arith.constant 0 : index
      %136 = vector.load %arg14[%c2_87, %c0_88, %c0_89] : memref<4x8x8xbf16, #tpu.memory_space<vmem>>, vector<1x8x8xbf16>
      %137 = vector.shape_cast %136 : vector<1x8x8xbf16> to vector<8x8xbf16>
      %138 = vector.shape_cast %135 : vector<8x8xbf16> to vector<1x8x8xbf16>
      tpu.vector_store %arg14[%c2_87, %c0_88, %c0_89], %138 {strides = array<i32>} : memref<4x8x8xbf16, #tpu.memory_space<vmem>>, vector<1x8x8xbf16>,
      %139 = vector.extract_strided_slice %113 {offsets = [0, 16], sizes = [8, 8], strides = [1, 1]} : vector<8x32xf32> to vector<8x8xf32>
      %140 = arith.truncf %139 : vector<8x8xf32> to vector<8x8xbf16>
      %c2_90 = arith.constant 2 : index
      %c0_91 = arith.constant 0 : index
      %c0_92 = arith.constant 0 : index
      %141 = vector.load %arg15[%c2_90, %c0_91, %c0_92] : memref<4x8x8xbf16, #tpu.memory_space<vmem>>, vector<1x8x8xbf16>
      %142 = vector.shape_cast %141 : vector<1x8x8xbf16> to vector<8x8xbf16>
      %143 = vector.shape_cast %140 : vector<8x8xbf16> to vector<1x8x8xbf16>
      tpu.vector_store %arg15[%c2_90, %c0_91, %c0_92], %143 {strides = array<i32>} : memref<4x8x8xbf16, #tpu.memory_space<vmem>>, vector<1x8x8xbf16>,
      %144 = vector.extract_strided_slice %106 {offsets = [0, 24], sizes = [8, 8], strides = [1, 1]} : vector<8x32xf32> to vector<8x8xf32>
      %145 = arith.truncf %144 : vector<8x8xf32> to vector<8x8xbf16>
      %c3_93 = arith.constant 3 : index
      %c0_94 = arith.constant 0 : index
      %c0_95 = arith.constant 0 : index
      %146 = vector.load %arg14[%c3_93, %c0_94, %c0_95] : memref<4x8x8xbf16, #tpu.memory_space<vmem>>, vector<1x8x8xbf16>
      %147 = vector.shape_cast %146 : vector<1x8x8xbf16> to vector<8x8xbf16>
      %148 = vector.shape_cast %145 : vector<8x8xbf16> to vector<1x8x8xbf16>
      tpu.vector_store %arg14[%c3_93, %c0_94, %c0_95], %148 {strides = array<i32>} : memref<4x8x8xbf16, #tpu.memory_space<vmem>>, vector<1x8x8xbf16>,
      %149 = vector.extract_strided_slice %113 {offsets = [0, 24], sizes = [8, 8], strides = [1, 1]} : vector<8x32xf32> to vector<8x8xf32>
      %150 = arith.truncf %149 : vector<8x8xf32> to vector<8x8xbf16>
      %c3_96 = arith.constant 3 : index
      %c0_97 = arith.constant 0 : index
      %c0_98 = arith.constant 0 : index
      %151 = vector.load %arg15[%c3_96, %c0_97, %c0_98] : memref<4x8x8xbf16, #tpu.memory_space<vmem>>, vector<1x8x8xbf16>
      %152 = vector.shape_cast %151 : vector<1x8x8xbf16> to vector<8x8xbf16>
      %153 = vector.shape_cast %150 : vector<8x8xbf16> to vector<1x8x8xbf16>
      tpu.vector_store %arg15[%c3_96, %c0_97, %c0_98], %153 {strides = array<i32>} : memref<4x8x8xbf16, #tpu.memory_space<vmem>>, vector<1x8x8xbf16>,
    } else {
    }
    %c0 = arith.constant 0 : index
    %c0_1 = arith.constant 0 : index
    %c0_2 = arith.constant 0 : index
    %3 = vector.load %arg2[%c0, %c0_1, %c0_2] : memref<1x8x32xbf16, #tpu.memory_space<vmem>>, vector<1x8x32xbf16>
    %4 = vector.shape_cast %3 : vector<1x8x32xbf16> to vector<8x32xbf16>
    %c0_3 = arith.constant 0 : index
    %c0_4 = arith.constant 0 : index
    %5 = vector.load %arg5[%c0_3, %c0_4] : memref<32x32xbf16, #tpu.memory_space<vmem>>, vector<32x32xbf16>
    %cst = arith.constant dense<0.000000e+00> : vector<8x32xf32>
    %6 = tpu.matmul %4, %5, %cst {dimension_numbers = #tpu.dot_dimension_numbers<[1], [0], [0], [1], [0, 0, 1, 1], [], []>} : vector<8x32xbf16>, vector<32x32xbf16>, vector<8x32xf32> -> vector<8x32xf32>
    %c0_5 = arith.constant 0 : index
    %c0_6 = arith.constant 0 : index
    %7 = vector.load %arg6[%c0_5, %c0_6] : memref<1x32xf32, #tpu.memory_space<vmem>>, vector<1x32xf32>
    %8 = vector.broadcast %7 : vector<1x32xf32> to vector<8x32xf32>
    %9 = arith.addf %6, %8 : vector<8x32xf32>
    %10 = arith.truncf %9 : vector<8x32xf32> to vector<8x32xbf16>
    %11 = vector.extract_strided_slice %10 {offsets = [0, 0], sizes = [8, 8], strides = [1, 1]} : vector<8x32xbf16> to vector<8x8xbf16>
    %c0_7 = arith.constant 0 : index
    %c0_8 = arith.constant 0 : index
    %c0_9 = arith.constant 0 : index
    %12 = vector.load %arg14[%c0_7, %c0_8, %c0_9] : memref<4x8x8xbf16, #tpu.memory_space<vmem>>, vector<1x8x8xbf16>
    %13 = vector.shape_cast %12 : vector<1x8x8xbf16> to vector<8x8xbf16>
    %c0_10 = arith.constant 0 : index
    %c0_11 = arith.constant 0 : index
    %c0_12 = arith.constant 0 : index
    %14 = vector.load %arg15[%c0_10, %c0_11, %c0_12] : memref<4x8x8xbf16, #tpu.memory_space<vmem>>, vector<1x8x8xbf16>
    %15 = vector.shape_cast %14 : vector<1x8x8xbf16> to vector<8x8xbf16>
    %cst_13 = arith.constant dense<0.000000e+00> : vector<8x8xf32>
    %16 = tpu.matmul %11, %13, %cst_13 {dimension_numbers = #tpu.dot_dimension_numbers<[1], [1], [0], [0], [0, 0, 1, 0], [], []>} : vector<8x8xbf16>, vector<8x8xbf16>, vector<8x8xf32> -> vector<8x8xf32>
    %cst_14 = arith.constant dense<0xFF800000> : vector<8xf32>
    %17 = vector.multi_reduction <maximumf>, %16, %cst_14 [1] : vector<8x8xf32> to vector<8xf32>
    %18 = vector.shape_cast %17 : vector<8xf32> to vector<8x1xf32>
    %19 = vector.broadcast %18 : vector<8x1xf32> to vector<8x8xf32>
    %20 = arith.subf %16, %19 : vector<8x8xf32>
    %21 = math.exp %20 : vector<8x8xf32>
    %cst_15 = arith.constant dense<0.000000e+00> : vector<8xf32>
    %22 = vector.multi_reduction <add>, %21, %cst_15 [1] : vector<8x8xf32> to vector<8xf32>
    %23 = vector.shape_cast %22 : vector<8xf32> to vector<8x1xf32>
    %24 = arith.truncf %21 : vector<8x8xf32> to vector<8x8xbf16>
    %cst_16 = arith.constant dense<0.000000e+00> : vector<8x8xf32>
    %25 = tpu.matmul %24, %15, %cst_16 {dimension_numbers = #tpu.dot_dimension_numbers<[1], [0], [0], [1], [0, 0, 1, 1], [], []>} : vector<8x8xbf16>, vector<8x8xbf16>, vector<8x8xf32> -> vector<8x8xf32>
    %26 = tpu.reciprocal %23 {approx = true} : vector<8x1xf32> -> vector<8x1xf32>
    %27 = vector.broadcast %26 : vector<8x1xf32> to vector<8x8xf32>
    %28 = arith.mulf %25, %27 : vector<8x8xf32>
    %29 = arith.truncf %28 : vector<8x8xf32> to vector<8x8xbf16>
    %c0_17 = arith.constant 0 : index
    %c0_18 = arith.constant 0 : index
    %30 = vector.load %arg16[%c0_17, %c0_18] : memref<8x32xbf16, #tpu.memory_space<vmem>>, vector<8x8xbf16>
    tpu.vector_store %arg16[%c0_17, %c0_18], %29 {strides = array<i32>} : memref<8x32xbf16, #tpu.memory_space<vmem>>, vector<8x8xbf16>,
    %31 = vector.extract_strided_slice %10 {offsets = [0, 8], sizes = [8, 8], strides = [1, 1]} : vector<8x32xbf16> to vector<8x8xbf16>
    %c1 = arith.constant 1 : index
    %c0_19 = arith.constant 0 : index
    %c0_20 = arith.constant 0 : index
    %32 = vector.load %arg14[%c1, %c0_19, %c0_20] : memref<4x8x8xbf16, #tpu.memory_space<vmem>>, vector<1x8x8xbf16>
    %33 = vector.shape_cast %32 : vector<1x8x8xbf16> to vector<8x8xbf16>
    %c1_21 = arith.constant 1 : index
    %c0_22 = arith.constant 0 : index
    %c0_23 = arith.constant 0 : index
    %34 = vector.load %arg15[%c1_21, %c0_22, %c0_23] : memref<4x8x8xbf16, #tpu.memory_space<vmem>>, vector<1x8x8xbf16>
    %35 = vector.shape_cast %34 : vector<1x8x8xbf16> to vector<8x8xbf16>
    %cst_24 = arith.constant dense<0.000000e+00> : vector<8x8xf32>
    %36 = tpu.matmul %31, %33, %cst_24 {dimension_numbers = #tpu.dot_dimension_numbers<[1], [1], [0], [0], [0, 0, 1, 0], [], []>} : vector<8x8xbf16>, vector<8x8xbf16>, vector<8x8xf32> -> vector<8x8xf32>
    %cst_25 = arith.constant dense<0xFF800000> : vector<8xf32>
    %37 = vector.multi_reduction <maximumf>, %36, %cst_25 [1] : vector<8x8xf32> to vector<8xf32>
    %38 = vector.shape_cast %37 : vector<8xf32> to vector<8x1xf32>
    %39 = vector.broadcast %38 : vector<8x1xf32> to vector<8x8xf32>
    %40 = arith.subf %36, %39 : vector<8x8xf32>
    %41 = math.exp %40 : vector<8x8xf32>
    %cst_26 = arith.constant dense<0.000000e+00> : vector<8xf32>
    %42 = vector.multi_reduction <add>, %41, %cst_26 [1] : vector<8x8xf32> to vector<8xf32>
    %43 = vector.shape_cast %42 : vector<8xf32> to vector<8x1xf32>
    %44 = arith.truncf %41 : vector<8x8xf32> to vector<8x8xbf16>
    %cst_27 = arith.constant dense<0.000000e+00> : vector<8x8xf32>
    %45 = tpu.matmul %44, %35, %cst_27 {dimension_numbers = #tpu.dot_dimension_numbers<[1], [0], [0], [1], [0, 0, 1, 1], [], []>} : vector<8x8xbf16>, vector<8x8xbf16>, vector<8x8xf32> -> vector<8x8xf32>
    %46 = tpu.reciprocal %43 {approx = true} : vector<8x1xf32> -> vector<8x1xf32>
    %47 = vector.broadcast %46 : vector<8x1xf32> to vector<8x8xf32>
    %48 = arith.mulf %45, %47 : vector<8x8xf32>
    %49 = arith.truncf %48 : vector<8x8xf32> to vector<8x8xbf16>
    %c0_28 = arith.constant 0 : index
    %c8 = arith.constant 8 : index
    %50 = vector.load %arg16[%c0_28, %c8] : memref<8x32xbf16, #tpu.memory_space<vmem>>, vector<8x8xbf16>
    tpu.vector_store %arg16[%c0_28, %c8], %49 {strides = array<i32>} : memref<8x32xbf16, #tpu.memory_space<vmem>>, vector<8x8xbf16>,
    %51 = vector.extract_strided_slice %10 {offsets = [0, 16], sizes = [8, 8], strides = [1, 1]} : vector<8x32xbf16> to vector<8x8xbf16>
    %c2 = arith.constant 2 : index
    %c0_29 = arith.constant 0 : index
    %c0_30 = arith.constant 0 : index
    %52 = vector.load %arg14[%c2, %c0_29, %c0_30] : memref<4x8x8xbf16, #tpu.memory_space<vmem>>, vector<1x8x8xbf16>
    %53 = vector.shape_cast %52 : vector<1x8x8xbf16> to vector<8x8xbf16>
    %c2_31 = arith.constant 2 : index
    %c0_32 = arith.constant 0 : index
    %c0_33 = arith.constant 0 : index
    %54 = vector.load %arg15[%c2_31, %c0_32, %c0_33] : memref<4x8x8xbf16, #tpu.memory_space<vmem>>, vector<1x8x8xbf16>
    %55 = vector.shape_cast %54 : vector<1x8x8xbf16> to vector<8x8xbf16>
    %cst_34 = arith.constant dense<0.000000e+00> : vector<8x8xf32>
    %56 = tpu.matmul %51, %53, %cst_34 {dimension_numbers = #tpu.dot_dimension_numbers<[1], [1], [0], [0], [0, 0, 1, 0], [], []>} : vector<8x8xbf16>, vector<8x8xbf16>, vector<8x8xf32> -> vector<8x8xf32>
    %cst_35 = arith.constant dense<0xFF800000> : vector<8xf32>
    %57 = vector.multi_reduction <maximumf>, %56, %cst_35 [1] : vector<8x8xf32> to vector<8xf32>
    %58 = vector.shape_cast %57 : vector<8xf32> to vector<8x1xf32>
    %59 = vector.broadcast %58 : vector<8x1xf32> to vector<8x8xf32>
    %60 = arith.subf %56, %59 : vector<8x8xf32>
    %61 = math.exp %60 : vector<8x8xf32>
    %cst_36 = arith.constant dense<0.000000e+00> : vector<8xf32>
    %62 = vector.multi_reduction <add>, %61, %cst_36 [1] : vector<8x8xf32> to vector<8xf32>
    %63 = vector.shape_cast %62 : vector<8xf32> to vector<8x1xf32>
    %64 = arith.truncf %61 : vector<8x8xf32> to vector<8x8xbf16>
    %cst_37 = arith.constant dense<0.000000e+00> : vector<8x8xf32>
    %65 = tpu.matmul %64, %55, %cst_37 {dimension_numbers = #tpu.dot_dimension_numbers<[1], [0], [0], [1], [0, 0, 1, 1], [], []>} : vector<8x8xbf16>, vector<8x8xbf16>, vector<8x8xf32> -> vector<8x8xf32>
    %66 = tpu.reciprocal %63 {approx = true} : vector<8x1xf32> -> vector<8x1xf32>
    %67 = vector.broadcast %66 : vector<8x1xf32> to vector<8x8xf32>
    %68 = arith.mulf %65, %67 : vector<8x8xf32>
    %69 = arith.truncf %68 : vector<8x8xf32> to vector<8x8xbf16>
    %c0_38 = arith.constant 0 : index
    %c16 = arith.constant 16 : index
    %70 = vector.load %arg16[%c0_38, %c16] : memref<8x32xbf16, #tpu.memory_space<vmem>>, vector<8x8xbf16>
    tpu.vector_store %arg16[%c0_38, %c16], %69 {strides = array<i32>} : memref<8x32xbf16, #tpu.memory_space<vmem>>, vector<8x8xbf16>,
    %71 = vector.extract_strided_slice %10 {offsets = [0, 24], sizes = [8, 8], strides = [1, 1]} : vector<8x32xbf16> to vector<8x8xbf16>
    %c3 = arith.constant 3 : index
    %c0_39 = arith.constant 0 : index
    %c0_40 = arith.constant 0 : index
    %72 = vector.load %arg14[%c3, %c0_39, %c0_40] : memref<4x8x8xbf16, #tpu.memory_space<vmem>>, vector<1x8x8xbf16>
    %73 = vector.shape_cast %72 : vector<1x8x8xbf16> to vector<8x8xbf16>
    %c3_41 = arith.constant 3 : index
    %c0_42 = arith.constant 0 : index
    %c0_43 = arith.constant 0 : index
    %74 = vector.load %arg15[%c3_41, %c0_42, %c0_43] : memref<4x8x8xbf16, #tpu.memory_space<vmem>>, vector<1x8x8xbf16>
    %75 = vector.shape_cast %74 : vector<1x8x8xbf16> to vector<8x8xbf16>
    %cst_44 = arith.constant dense<0.000000e+00> : vector<8x8xf32>
    %76 = tpu.matmul %71, %73, %cst_44 {dimension_numbers = #tpu.dot_dimension_numbers<[1], [1], [0], [0], [0, 0, 1, 0], [], []>} : vector<8x8xbf16>, vector<8x8xbf16>, vector<8x8xf32> -> vector<8x8xf32>
    %cst_45 = arith.constant dense<0xFF800000> : vector<8xf32>
    %77 = vector.multi_reduction <maximumf>, %76, %cst_45 [1] : vector<8x8xf32> to vector<8xf32>
    %78 = vector.shape_cast %77 : vector<8xf32> to vector<8x1xf32>
    %79 = vector.broadcast %78 : vector<8x1xf32> to vector<8x8xf32>
    %80 = arith.subf %76, %79 : vector<8x8xf32>
    %81 = math.exp %80 : vector<8x8xf32>
    %cst_46 = arith.constant dense<0.000000e+00> : vector<8xf32>
    %82 = vector.multi_reduction <add>, %81, %cst_46 [1] : vector<8x8xf32> to vector<8xf32>
    %83 = vector.shape_cast %82 : vector<8xf32> to vector<8x1xf32>
    %84 = arith.truncf %81 : vector<8x8xf32> to vector<8x8xbf16>
    %cst_47 = arith.constant dense<0.000000e+00> : vector<8x8xf32>
    %85 = tpu.matmul %84, %75, %cst_47 {dimension_numbers = #tpu.dot_dimension_numbers<[1], [0], [0], [1], [0, 0, 1, 1], [], []>} : vector<8x8xbf16>, vector<8x8xbf16>, vector<8x8xf32> -> vector<8x8xf32>
    %86 = tpu.reciprocal %83 {approx = true} : vector<8x1xf32> -> vector<8x1xf32>
    %87 = vector.broadcast %86 : vector<8x1xf32> to vector<8x8xf32>
    %88 = arith.mulf %85, %87 : vector<8x8xf32>
    %89 = arith.truncf %88 : vector<8x8xf32> to vector<8x8xbf16>
    %c0_48 = arith.constant 0 : index
    %c24 = arith.constant 24 : index
    %90 = vector.load %arg16[%c0_48, %c24] : memref<8x32xbf16, #tpu.memory_space<vmem>>, vector<8x8xbf16>
    tpu.vector_store %arg16[%c0_48, %c24], %89 {strides = array<i32>} : memref<8x32xbf16, #tpu.memory_space<vmem>>, vector<8x8xbf16>,
    %c0_49 = arith.constant 0 : index
    %c0_50 = arith.constant 0 : index
    %91 = vector.load %arg16[%c0_49, %c0_50] : memref<8x32xbf16, #tpu.memory_space<vmem>>, vector<8x32xbf16>
    %c0_51 = arith.constant 0 : index
    %c0_52 = arith.constant 0 : index
    %92 = vector.load %arg11[%c0_51, %c0_52] : memref<32x32xbf16, #tpu.memory_space<vmem>>, vector<32x32xbf16>
    %cst_53 = arith.constant dense<0.000000e+00> : vector<8x32xf32>
    %93 = tpu.matmul %91, %92, %cst_53 {dimension_numbers = #tpu.dot_dimension_numbers<[1], [0], [0], [1], [0, 0, 1, 1], [], []>} : vector<8x32xbf16>, vector<32x32xbf16>, vector<8x32xf32> -> vector<8x32xf32>
    %c0_54 = arith.constant 0 : index
    %c0_55 = arith.constant 0 : index
    %94 = vector.load %arg12[%c0_54, %c0_55] : memref<1x32xf32, #tpu.memory_space<vmem>>, vector<1x32xf32>
    %95 = vector.broadcast %94 : vector<1x32xf32> to vector<8x32xf32>
    %96 = arith.addf %93, %95 : vector<8x32xf32>
    %c0_56 = arith.constant 0 : index
    %c0_57 = arith.constant 0 : index
    %c0_58 = arith.constant 0 : index
    %97 = vector.load %arg13[%c0_56, %c0_57, %c0_58] : memref<1x8x32xf32, #tpu.memory_space<vmem>>, vector<1x8x32xf32>
    %98 = vector.shape_cast %97 : vector<1x8x32xf32> to vector<8x32xf32>
    %99 = vector.shape_cast %96 : vector<8x32xf32> to vector<1x8x32xf32>
    tpu.vector_store %arg13[%c0_56, %c0_57, %c0_58], %99 {strides = array<i32>} : memref<1x8x32xf32, #tpu.memory_space<vmem>>, vector<1x8x32xf32>,
    return
  }
  func.func @transform_0(%arg0: i32, %arg1: i32) -> (i32, i32, i32) {
    %c0_i32 = arith.constant 0 : i32
    %c0_i32_0 = arith.constant 0 : i32
    return %arg0, %arg1, %c0_i32 : i32, i32, i32
  }
  func.func @transform_1(%arg0: i32, %arg1: i32) -> (i32, i32, i32) {
    %c0_i32 = arith.constant 0 : i32
    %c0_i32_0 = arith.constant 0 : i32
    %c0_i32_1 = arith.constant 0 : i32
    return %arg0, %c0_i32, %c0_i32_0 : i32, i32, i32
  }
  func.func @transform_2(%arg0: i32, %arg1: i32) -> (i32, i32, i32) {
    %c0_i32 = arith.constant 0 : i32
    %c0_i32_0 = arith.constant 0 : i32
    %c0_i32_1 = arith.constant 0 : i32
    return %arg0, %c0_i32, %c0_i32_0 : i32, i32, i32
  }
  func.func @transform_3(%arg0: i32, %arg1: i32) -> (i32, i32) {
    %c0_i32 = arith.constant 0 : i32
    %c0_i32_0 = arith.constant 0 : i32
    %c0_i32_1 = arith.constant 0 : i32
    return %c0_i32, %c0_i32_0 : i32, i32
  }
  func.func @transform_4(%arg0: i32, %arg1: i32) -> (i32, i32) {
    %c0_i32 = arith.constant 0 : i32
    %c0_i32_0 = arith.constant 0 : i32
    %c0_i32_1 = arith.constant 0 : i32
    return %c0_i32, %c0_i32_0 : i32, i32
  }
  func.func @transform_5(%arg0: i32, %arg1: i32) -> (i32, i32) {
    %c0_i32 = arith.constant 0 : i32
    %c0_i32_0 = arith.constant 0 : i32
    %c0_i32_1 = arith.constant 0 : i32
    return %c0_i32, %c0_i32_0 : i32, i32
  }
  func.func @transform_6(%arg0: i32, %arg1: i32) -> (i32, i32) {
    %c0_i32 = arith.constant 0 : i32
    %c0_i32_0 = arith.constant 0 : i32
    %c0_i32_1 = arith.constant 0 : i32
    return %c0_i32, %c0_i32_0 : i32, i32
  }
  func.func @transform_7(%arg0: i32, %arg1: i32) -> (i32, i32) {
    %c0_i32 = arith.constant 0 : i32
    %c0_i32_0 = arith.constant 0 : i32
    %c0_i32_1 = arith.constant 0 : i32
    return %c0_i32, %c0_i32_0 : i32, i32
  }
  func.func @transform_8(%arg0: i32, %arg1: i32) -> (i32, i32) {
    %c0_i32 = arith.constant 0 : i32
    %c0_i32_0 = arith.constant 0 : i32
    %c0_i32_1 = arith.constant 0 : i32
    return %c0_i32, %c0_i32_0 : i32, i32
  }
  func.func @transform_9(%arg0: i32, %arg1: i32) -> (i32, i32) {
    %c0_i32 = arith.constant 0 : i32
    %c0_i32_0 = arith.constant 0 : i32
    %c0_i32_1 = arith.constant 0 : i32
    return %c0_i32, %c0_i32_0 : i32, i32
  }
  func.func @transform_10(%arg0: i32, %arg1: i32) -> (i32, i32) {
    %c0_i32 = arith.constant 0 : i32
    %c0_i32_0 = arith.constant 0 : i32
    %c0_i32_1 = arith.constant 0 : i32
    return %c0_i32, %c0_i32_0 : i32, i32
  }
  func.func @transform_11(%arg0: i32, %arg1: i32) -> (i32, i32, i32) {
    %c0_i32 = arith.constant 0 : i32
    %c0_i32_0 = arith.constant 0 : i32
    return %arg0, %arg1, %c0_i32 : i32, i32, i32
  }
}

</mosaic_0001>

<llo_original>
// kernel: tpu_custom_call.1
$region0: #{tpu_custom_call.1}
  #allocation0 [shape = 'u32[]', space=smem, size = 0x4, offset = 0x4, fixed_abs, tag = 'smem constant byte address 0x4 - core index']
  #allocation1 [shape = 'u32[144,128]{1,0:T(1,128)}', space=vmem, size = 0x12000, scoped, tag = 'internal scratch']
  #allocation2 [shape = 'bf16[4,8,8]{2,1,0:T(8,128)(2,1)}', space=vmem, size = 0x2000, scoped, tag = 'scratch operand']
  #allocation3 [shape = 'bf16[4,8,8]{2,1,0:T(8,128)(2,1)}', space=vmem, size = 0x2000, scoped, tag = 'scratch operand']
  #allocation4 [shape = 'bf16[8,32]{1,0:T(8,128)(2,1)}', space=vmem, size = 0x800, scoped, tag = 'scratch operand']
  %s0 = inlined_call_operand.hbm [shape: bf16[2,8,32], index: 0, kind: input, shape index: {}]
  %s1 = inlined_call_operand.hbm [shape: bf16[2,8,32], index: 1, kind: input, shape index: {}]
  %s2 = inlined_call_operand.hbm [shape: bf16[2,8,32], index: 2, kind: input, shape index: {}]
  %s3 = inlined_call_operand.hbm [shape: bf16[32,32], index: 3, kind: input, shape index: {}]
  %s4 = inlined_call_operand.vmem [shape: f32[1,32], index: 4, kind: input, shape index: {}]
  %s5 = inlined_call_operand.vmem [shape: bf16[32,32], index: 5, kind: input, shape index: {}]
  %s6 = inlined_call_operand.vmem [shape: f32[1,32], index: 6, kind: input, shape index: {}]
  %s7 = inlined_call_operand.hbm [shape: bf16[32,32], index: 7, kind: input, shape index: {}]
  %s8 = inlined_call_operand.hbm [shape: f32[1,32], index: 8, kind: input, shape index: {}]
  %s9 = inlined_call_operand.vmem [shape: bf16[32,32], index: 9, kind: input, shape index: {}]
  %s10 = inlined_call_operand.vmem [shape: f32[1,32], index: 10, kind: input, shape index: {}]
  %s11 = inlined_call_operand.hbm [shape: f32[2,8,32], index: 11, kind: output, shape index: {}]
  %s12 = sld [smem:[#allocation0]]
  $region105: #{tpu_custom_call.1} parent=0
    _
  %s14 = ssub.s32 1, %s12
  %s15 = scalar_select 0, %s14, %s12
  $region1: #{tpu_custom_call.1} parent=0
    #allocation5 [shape = 'u8[4096]{0}', space=vmem, size = 0x1000, scoped, tag = 'input window, operand 0']
    #allocation6 [shape = 's32[2]{0}', space=sflag, size = 0x8, scoped, tag = 'scoped memory for tpu_custom_call.1']
    #allocation7 [shape = 's32[2]{0}', space=sflag, size = 0x8, scoped, tag = 'scoped memory for tpu_custom_call.1']
    #allocation8 [shape = 'u8[4096]{0}', space=vmem, size = 0x1000, scoped, tag = 'input window, operand 1']
    #allocation9 [shape = 's32[2]{0}', space=sflag, size = 0x8, scoped, tag = 'scoped memory for tpu_custom_call.1']
    #allocation10 [shape = 'u8[4096]{0}', space=vmem, size = 0x1000, scoped, tag = 'input window, operand 2']
    #allocation11 [shape = 'u8[8192]{0}', space=vmem, size = 0x2000, scoped, tag = 'input window, operand 3, single buffered']
    #allocation12 [shape = 's32[1]{0}', space=sflag, size = 0x4, scoped, tag = 'scoped memory for tpu_custom_call.1']
    #allocation13 [shape = 'u8[8192]{0}', space=vmem, size = 0x2000, scoped, tag = 'input window, operand 7, single buffered']
    #allocation14 [shape = 'u8[512]{0}', space=vmem, size = 0x400, scoped, tag = 'input window, operand 8, single buffered']
    #allocation15 [shape = 's32[1]{0}', space=sflag, size = 0x4, scoped, tag = 'scoped memory for tpu_custom_call.1']
    #allocation16 [shape = 'u8[8192]{0}', space=vmem, size = 0x2000, scoped, tag = 'output window, operand 0']
    %16 = vsyncpa [#allocation6], 0
    %s17 = scalar_lea.sflag [#allocation6], 1
    %18 = vsyncpa %s17, 0
    %19 = vsyncpa [#allocation9], 0
    %s20 = scalar_lea.sflag [#allocation9], 1
    %21 = vsyncpa %s20, 0
    %22 = vsyncpa [#allocation12], 0
    %23 = vsyncpa [#allocation15], 0
    %24 = vsyncpa [#allocation7], 0
    %s25 = scalar_lea.sflag [#allocation7], 1
    %26 = vsyncpa %s25, 0
    loop: start=0, step=1, limit=4
    $region2: #{tpu_custom_call.1} parent=1 // loop_pre_header
      _
    $region3: #{tpu_custom_call.1} parent=1 // loop_header
      %s28 = sphi 0, %s32
      %p29 = scmp.ge.s32.totalorder %s28, 4
      %s35 = sphi 0, %s47
      %s36 = sphi 0, %s43
      %s37 = sphi 0, %s35
      %s38 = sphi 0, %s36
      %s39 = sphi 0, %s37
      %s40 = sphi 0, %s38
      %s52 = sphi 0, %s54
      %s55 = sphi 0, %s52
      %s56 = sphi 0, %s55
      %s72 = sphi 0, %s56
      %s78 = sphi 0, %s80
      %s81 = sphi 0, %s78
      %s82 = sphi 0, %s81
      %s98 = sphi 0, %s82
      %s104 = sphi 0, %s106
      %s107 = sphi 0, %s104
      %s108 = sphi 0, %s107
      %s124 = sphi 0, %s108
      %s128 = sphi 0, %s128
      %s130 = sphi 0, %s128
      %s131 = sphi 0, %s130
      %s145 = sphi 0, %s131
      %s149 = sphi 0, %s149
      %s151 = sphi 0, %s149
      %s152 = sphi 0, %s151
      %s166 = sphi 0, %s152
      %s170 = sphi 0, %s170
      %s172 = sphi 0, %s170
      %s173 = sphi 0, %s172
      %s187 = sphi 0, %s173
      %s191 = sphi 0, %s191
      %s193 = sphi 0, %s191
      %s194 = sphi 0, %s193
      %s208 = sphi 0, %s194
      %s212 = sphi 0, %s212
      %s214 = sphi 0, %s212
      %s215 = sphi 0, %s214
      %s229 = sphi 0, %s215
      %s233 = sphi 0, %s233
      %s235 = sphi 0, %s233
      %s236 = sphi 0, %s235
      %s250 = sphi 0, %s236
      %s254 = sphi 0, %s254
      %s256 = sphi 0, %s254
      %s257 = sphi 0, %s256
      %s271 = sphi 0, %s257
      %s275 = sphi 0, %s275
      %s277 = sphi 0, %s275
      %s278 = sphi 0, %s277
      %s292 = sphi 0, %s278
      %s300 = sphi 0, %s302
      %s303 = sphi 0, %s300
      %s304 = sphi 0, %s303
      %s320 = sphi 0, %s304
    $region4: #{tpu_custom_call.1} parent=1 // loop_header_branch
      %31 = sbr.rel (%p29) target = $region8
    $region5: #{tpu_custom_call.1} parent=1 // loop_body
      %s33 = ssub.s32 %s28, 1
      %s34 = ssub.s32 %s28, 2
      %s41 = sadd.s32 1, %s36
      %p42 = scmp.ge.s32.totalorder %s41, 1
      %s43 = scalar_select %p42, 0, %s41
      %s44 = sadd.s32 1, %s35
      %s45 = scalar_select %p42, %s44, %s35
      %p46 = scmp.ge.s32.totalorder %s45, 2
      %s47 = scalar_select %p46, 0, %s45
      %s48 = ssub.s32 %s35, %s47
      %s49 = ssub.s32 %s36, %s43
      %s50 = sor.u32 %s48, %s49
      %p51 = scmp.eq.s32.totalorder %s50, 0
      %s53 = sadd.s32 %s52, 1
      %s54 = scalar_select %p51, %s52, %s53
      %p57 = pneg %p51
      %p58 = scmp.eq.s32.totalorder %s28, 1
      %p59 = por %p57, %p58
      %p60 = scmp.ne.s32.totalorder %s52, %s55
      %p61 = scmp.eq.s32.totalorder %s28, 0
      %p62 = por %p60, %p61
      %p63 = scmp.ne.s32.totalorder %s52, %s55
      %p64 = scmp.eq.s32.totalorder %s33, 1
      %p65 = por %p63, %p64
      %p66 = scmp.ne.s32.totalorder %s55, %s56
      %p67 = scmp.eq.s32.totalorder %s33, 0
      %p68 = por %p66, %p67
      %p69 = scmp.ne.s32.totalorder %s55, %s56
      %p70 = scmp.eq.s32.totalorder %s34, 1
      %p71 = por %p69, %p70
      %p73 = scmp.ne.s32.totalorder %s56, %s72
      %p74 = scmp.eq.s32.totalorder %s34, 0
      %p75 = por %p73, %p74
      %s76 = ssub.s32 %s35, %s47
      %p77 = scmp.eq.s32.totalorder %s76, 0
      %s79 = sadd.s32 %s78, 1
      %s80 = scalar_select %p77, %s78, %s79
      %p83 = pneg %p77
      %p84 = scmp.eq.s32.totalorder %s28, 1
      %p85 = por %p83, %p84
      %p86 = scmp.ne.s32.totalorder %s78, %s81
      %p87 = scmp.eq.s32.totalorder %s28, 0
      %p88 = por %p86, %p87
      %p89 = scmp.ne.s32.totalorder %s78, %s81
      %p90 = scmp.eq.s32.totalorder %s33, 1
      %p91 = por %p89, %p90
      %p92 = scmp.ne.s32.totalorder %s81, %s82
      %p93 = scmp.eq.s32.totalorder %s33, 0
      %p94 = por %p92, %p93
      %p95 = scmp.ne.s32.totalorder %s81, %s82
      %p96 = scmp.eq.s32.totalorder %s34, 1
      %p97 = por %p95, %p96
      %p99 = scmp.ne.s32.totalorder %s82, %s98
      %p100 = scmp.eq.s32.totalorder %s34, 0
      %p101 = por %p99, %p100
      %s102 = ssub.s32 %s35, %s47
      %p103 = scmp.eq.s32.totalorder %s102, 0
      %s105 = sadd.s32 %s104, 1
      %s106 = scalar_select %p103, %s104, %s105
      %p109 = pneg %p103
      %p110 = scmp.eq.s32.totalorder %s28, 1
      %p111 = por %p109, %p110
      %p112 = scmp.ne.s32.totalorder %s104, %s107
      %p113 = scmp.eq.s32.totalorder %s28, 0
      %p114 = por %p112, %p113
      %p115 = scmp.ne.s32.totalorder %s104, %s107
      %p116 = scmp.eq.s32.totalorder %s33, 1
      %p117 = por %p115, %p116
      %p118 = scmp.ne.s32.totalorder %s107, %s108
      %p119 = scmp.eq.s32.totalorder %s33, 0
      %p120 = por %p118, %p119
      %p121 = scmp.ne.s32.totalorder %s107, %s108
      %p122 = scmp.eq.s32.totalorder %s34, 1
      %p123 = por %p121, %p122
      %p125 = scmp.ne.s32.totalorder %s108, %s124
      %p126 = scmp.eq.s32.totalorder %s34, 0
      %p127 = por %p125, %p126
      %s129 = sadd.s32 %s128, 1
      %p132 = scmp.eq.s32.totalorder %s28, 1
      %p133 = scmp.ne.s32.totalorder %s128, %s130
      %p134 = scmp.eq.s32.totalorder %s28, 0
      %p135 = por %p133, %p134
      %p136 = scmp.ne.s32.totalorder %s128, %s130
      %p137 = scmp.eq.s32.totalorder %s33, 1
      %p138 = por %p136, %p137
      %p139 = scmp.ne.s32.totalorder %s130, %s131
      %p140 = scmp.eq.s32.totalorder %s33, 0
      %p141 = por %p139, %p140
      %p142 = scmp.ne.s32.totalorder %s130, %s131
      %p143 = scmp.eq.s32.totalorder %s34, 1
      %p144 = por %p142, %p143
      %p146 = scmp.ne.s32.totalorder %s131, %s145
      %p147 = scmp.eq.s32.totalorder %s34, 0
      %p148 = por %p146, %p147
      %s150 = sadd.s32 %s149, 1
      %p153 = scmp.eq.s32.totalorder %s28, 1
      %p154 = scmp.ne.s32.totalorder %s149, %s151
      %p155 = scmp.eq.s32.totalorder %s28, 0
      %p156 = por %p154, %p155
      %p157 = scmp.ne.s32.totalorder %s149, %s151
      %p158 = scmp.eq.s32.totalorder %s33, 1
      %p159 = por %p157, %p158
      %p160 = scmp.ne.s32.totalorder %s151, %s152
      %p161 = scmp.eq.s32.totalorder %s33, 0
      %p162 = por %p160, %p161
      %p163 = scmp.ne.s32.totalorder %s151, %s152
      %p164 = scmp.eq.s32.totalorder %s34, 1
      %p165 = por %p163, %p164
      %p167 = scmp.ne.s32.totalorder %s152, %s166
      %p168 = scmp.eq.s32.totalorder %s34, 0
      %p169 = por %p167, %p168
      %s171 = sadd.s32 %s170, 1
      %p174 = scmp.eq.s32.totalorder %s28, 1
      %p175 = scmp.ne.s32.totalorder %s170, %s172
      %p176 = scmp.eq.s32.totalorder %s28, 0
      %p177 = por %p175, %p176
      %p178 = scmp.ne.s32.totalorder %s170, %s172
      %p179 = scmp.eq.s32.totalorder %s33, 1
      %p180 = por %p178, %p179
      %p181 = scmp.ne.s32.totalorder %s172, %s173
      %p182 = scmp.eq.s32.totalorder %s33, 0
      %p183 = por %p181, %p182
      %p184 = scmp.ne.s32.totalorder %s172, %s173
      %p185 = scmp.eq.s32.totalorder %s34, 1
      %p186 = por %p184, %p185
      %p188 = scmp.ne.s32.totalorder %s173, %s187
      %p189 = scmp.eq.s32.totalorder %s34, 0
      %p190 = por %p188, %p189
      %s192 = sadd.s32 %s191, 1
      %p195 = scmp.eq.s32.totalorder %s28, 1
      %p196 = scmp.ne.s32.totalorder %s191, %s193
      %p197 = scmp.eq.s32.totalorder %s28, 0
      %p198 = por %p196, %p197
      %p199 = scmp.ne.s32.totalorder %s191, %s193
      %p200 = scmp.eq.s32.totalorder %s33, 1
      %p201 = por %p199, %p200
      %p202 = scmp.ne.s32.totalorder %s193, %s194
      %p203 = scmp.eq.s32.totalorder %s33, 0
      %p204 = por %p202, %p203
      %p205 = scmp.ne.s32.totalorder %s193, %s194
      %p206 = scmp.eq.s32.totalorder %s34, 1
      %p207 = por %p205, %p206
      %p209 = scmp.ne.s32.totalorder %s194, %s208
      %p210 = scmp.eq.s32.totalorder %s34, 0
      %p211 = por %p209, %p210
      %s213 = sadd.s32 %s212, 1
      %p216 = scmp.eq.s32.totalorder %s28, 1
      %p217 = scmp.ne.s32.totalorder %s212, %s214
      %p218 = scmp.eq.s32.totalorder %s28, 0
      %p219 = por %p217, %p218
      %p220 = scmp.ne.s32.totalorder %s212, %s214
      %p221 = scmp.eq.s32.totalorder %s33, 1
      %p222 = por %p220, %p221
      %p223 = scmp.ne.s32.totalorder %s214, %s215
      %p224 = scmp.eq.s32.totalorder %s33, 0
      %p225 = por %p223, %p224
      %p226 = scmp.ne.s32.totalorder %s214, %s215
      %p227 = scmp.eq.s32.totalorder %s34, 1
      %p228 = por %p226, %p227
      %p230 = scmp.ne.s32.totalorder %s215, %s229
      %p231 = scmp.eq.s32.totalorder %s34, 0
      %p232 = por %p230, %p231
      %s234 = sadd.s32 %s233, 1
      %p237 = scmp.eq.s32.totalorder %s28, 1
      %p238 = scmp.ne.s32.totalorder %s233, %s235
      %p239 = scmp.eq.s32.totalorder %s28, 0
      %p240 = por %p238, %p239
      %p241 = scmp.ne.s32.totalorder %s233, %s235
      %p242 = scmp.eq.s32.totalorder %s33, 1
      %p243 = por %p241, %p242
      %p244 = scmp.ne.s32.totalorder %s235, %s236
      %p245 = scmp.eq.s32.totalorder %s33, 0
      %p246 = por %p244, %p245
      %p247 = scmp.ne.s32.totalorder %s235, %s236
      %p248 = scmp.eq.s32.totalorder %s34, 1
      %p249 = por %p247, %p248
      %p251 = scmp.ne.s32.totalorder %s236, %s250
      %p252 = scmp.eq.s32.totalorder %s34, 0
      %p253 = por %p251, %p252
      %s255 = sadd.s32 %s254, 1
      %p258 = scmp.eq.s32.totalorder %s28, 1
      %p259 = scmp.ne.s32.totalorder %s254, %s256
      %p260 = scmp.eq.s32.totalorder %s28, 0
      %p261 = por %p259, %p260
      %p262 = scmp.ne.s32.totalorder %s254, %s256
      %p263 = scmp.eq.s32.totalorder %s33, 1
      %p264 = por %p262, %p263
      %p265 = scmp.ne.s32.totalorder %s256, %s257
      %p266 = scmp.eq.s32.totalorder %s33, 0
      %p267 = por %p265, %p266
      %p268 = scmp.ne.s32.totalorder %s256, %s257
      %p269 = scmp.eq.s32.totalorder %s34, 1
      %p270 = por %p268, %p269
      %p272 = scmp.ne.s32.totalorder %s257, %s271
      %p273 = scmp.eq.s32.totalorder %s34, 0
      %p274 = por %p272, %p273
      %s276 = sadd.s32 %s275, 1
      %p279 = scmp.eq.s32.totalorder %s28, 1
      %p280 = scmp.ne.s32.totalorder %s275, %s277
      %p281 = scmp.eq.s32.totalorder %s28, 0
      %p282 = por %p280, %p281
      %p283 = scmp.ne.s32.totalorder %s275, %s277
      %p284 = scmp.eq.s32.totalorder %s33, 1
      %p285 = por %p283, %p284
      %p286 = scmp.ne.s32.totalorder %s277, %s278
      %p287 = scmp.eq.s32.totalorder %s33, 0
      %p288 = por %p286, %p287
      %p289 = scmp.ne.s32.totalorder %s277, %s278
      %p290 = scmp.eq.s32.totalorder %s34, 1
      %p291 = por %p289, %p290
      %p293 = scmp.ne.s32.totalorder %s278, %s292
      %p294 = scmp.eq.s32.totalorder %s34, 0
      %p295 = por %p293, %p294
      %s296 = ssub.s32 %s35, %s47
      %s297 = ssub.s32 %s36, %s43
      %s298 = sor.u32 %s296, %s297
      %p299 = scmp.eq.s32.totalorder %s298, 0
      %s301 = sadd.s32 %s300, 1
      %s302 = scalar_select %p299, %s300, %s301
      %p305 = pneg %p299
      %p306 = scmp.eq.s32.totalorder %s28, 1
      %p307 = por %p305, %p306
      %p308 = scmp.ne.s32.totalorder %s300, %s303
      %p309 = scmp.eq.s32.totalorder %s28, 0
      %p310 = por %p308, %p309
      %p311 = scmp.ne.s32.totalorder %s300, %s303
      %p312 = scmp.eq.s32.totalorder %s33, 1
      %p313 = por %p311, %p312
      %p314 = scmp.ne.s32.totalorder %s303, %s304
      %p315 = scmp.eq.s32.totalorder %s33, 0
      %p316 = por %p314, %p315
      %p317 = scmp.ne.s32.totalorder %s303, %s304
      %p318 = scmp.eq.s32.totalorder %s34, 1
      %p319 = por %p317, %p318
      %p321 = scmp.ne.s32.totalorder %s304, %s320
      %p322 = scmp.eq.s32.totalorder %s34, 0
      %p323 = por %p321, %p322
      %p324 = scmp.le.s32.totalorder 1, %s28
      %p325 = scmp.lt.s32.totalorder %s28, 3
      %p326 = pnand %p324, %p325
      %p327 = pneg %p326
      // Predicated region
      $region9: #{tpu_custom_call.1} parent=5 // pred_check
        _
      $region10: #{tpu_custom_call.1} parent=5 // pred_check_branch
        %329 = sbr.rel (%p326) target = $region12
      $region11: #{tpu_custom_call.1} parent=5 // pred_region
        %s330 = ssub.s32 %s28, 1
        // Predicated region
        $region13: #{tpu_custom_call.1} parent=11 // pred_check
          %p331 = pneg %p141
        $region14: #{tpu_custom_call.1} parent=11 // pred_check_branch
          %333 = sbr.rel (%p331) target = $region16
        $region15: #{tpu_custom_call.1} parent=11 // pred_region
          %s335 = ssub.s32 256, 256
          %336 = vsyncadd [#allocation12], %s335
          %s337 = sshll.u32 [#allocation11], 4
          %s338 = int_to_ptr.vmem [resolvable:$true] %s337
          %343 = dma.hbm_to_vmem [thread:$0]  %s3, 256, %s338, [#allocation12], 64, 64, 4
        $region16: #{tpu_custom_call.1} parent=11 // pred_fallthru
          _
        // Predicated region
        $region17: #{tpu_custom_call.1} parent=11 // pred_check
          %p344 = pneg %p162
        $region18: #{tpu_custom_call.1} parent=11 // pred_check_branch
          %346 = sbr.rel (%p344) target = $region20
        $region19: #{tpu_custom_call.1} parent=11 // pred_region
          _
        $region20: #{tpu_custom_call.1} parent=11 // pred_fallthru
          _
        // Predicated region
        $region21: #{tpu_custom_call.1} parent=11 // pred_check
          %p347 = pneg %p183
        $region22: #{tpu_custom_call.1} parent=11 // pred_check_branch
          %349 = sbr.rel (%p347) target = $region24
        $region23: #{tpu_custom_call.1} parent=11 // pred_region
          _
        $region24: #{tpu_custom_call.1} parent=11 // pred_fallthru
          _
        // Predicated region
        $region25: #{tpu_custom_call.1} parent=11 // pred_check
          %p350 = pneg %p204
        $region26: #{tpu_custom_call.1} parent=11 // pred_check_branch
          %352 = sbr.rel (%p350) target = $region28
        $region27: #{tpu_custom_call.1} parent=11 // pred_region
          _
        $region28: #{tpu_custom_call.1} parent=11 // pred_fallthru
          _
        // Predicated region
        $region29: #{tpu_custom_call.1} parent=11 // pred_check
          %p353 = pneg %p225
        $region30: #{tpu_custom_call.1} parent=11 // pred_check_branch
          %355 = sbr.rel (%p353) target = $region32
        $region31: #{tpu_custom_call.1} parent=11 // pred_region
          %s357 = ssub.s32 256, 256
          %358 = vsyncadd [#allocation12], %s357
          %s359 = sshll.u32 [#allocation13], 4
          %s360 = int_to_ptr.vmem [resolvable:$true] %s359
          %365 = dma.hbm_to_vmem [thread:$0]  %s7, 256, %s360, [#allocation12], 64, 64, 4
        $region32: #{tpu_custom_call.1} parent=11 // pred_fallthru
          _
        // Predicated region
        $region33: #{tpu_custom_call.1} parent=11 // pred_check
          %p366 = pneg %p246
        $region34: #{tpu_custom_call.1} parent=11 // pred_check_branch
          %368 = sbr.rel (%p366) target = $region36
        $region35: #{tpu_custom_call.1} parent=11 // pred_region
          %s370 = ssub.s32 16, 16
          %371 = vsyncadd [#allocation15], %s370
          %s373 = sshll.u32 [#allocation14], 4
          %s374 = int_to_ptr.vmem [resolvable:$true] %s373
          %376 = dma.hbm_to_vmem [thread:$0]  %s8, 16, %s374, [#allocation15]
        $region36: #{tpu_custom_call.1} parent=11 // pred_fallthru
          _
        // Predicated region
        $region37: #{tpu_custom_call.1} parent=11 // pred_check
          %p377 = pneg %p267
        $region38: #{tpu_custom_call.1} parent=11 // pred_check_branch
          %379 = sbr.rel (%p377) target = $region40
        $region39: #{tpu_custom_call.1} parent=11 // pred_region
          _
        $region40: #{tpu_custom_call.1} parent=11 // pred_fallthru
          _
        // Predicated region
        $region41: #{tpu_custom_call.1} parent=11 // pred_check
          %p380 = pneg %p288
        $region42: #{tpu_custom_call.1} parent=11 // pred_check_branch
          %382 = sbr.rel (%p380) target = $region44
        $region43: #{tpu_custom_call.1} parent=11 // pred_region
          _
        $region44: #{tpu_custom_call.1} parent=11 // pred_fallthru
          _
      $region12: #{tpu_custom_call.1} parent=5 // pred_fallthru
        _
      %p383 = scmp.lt.s32.totalorder %s28, 2
      // Predicated region
      $region45: #{tpu_custom_call.1} parent=5 // pred_check
        %p384 = pneg %p383
      $region46: #{tpu_custom_call.1} parent=5 // pred_check_branch
        %386 = sbr.rel (%p384) target = $region48
      $region47: #{tpu_custom_call.1} parent=5 // pred_region
        // Predicated region
        $region49: #{tpu_custom_call.1} parent=47 // pred_check
          %p387 = pneg %p62
        $region50: #{tpu_custom_call.1} parent=47 // pred_check_branch
          %389 = sbr.rel (%p387) target = $region52
        $region51: #{tpu_custom_call.1} parent=47 // pred_region
          %s390 = sand.u32 %s52, 1
          %s391 = scalar_lea.sflag [#allocation6], %s390
          %s392 = sand.u32 %s52, 1
          %s393 = smul.addr %s392, 4
          %s394 = scalar_lea.vmem [#allocation5], %s393
          %s396 = ssub.s32 64, 64
          %397 = vsyncadd %s391, %s396
          %s398 = sadd.s32 %s36, %s35
          %s399 = smul.addr %s398, 64
          %s400 = scalar_lea.hbm %s0, %s399
          %s402 = sshll.u32 %s394, 4
          %s403 = int_to_ptr.vmem [resolvable:$true] %s402
          %405 = dma.hbm_to_vmem [thread:$0]  %s400, 64, %s403, %s391
        $region52: #{tpu_custom_call.1} parent=47 // pred_fallthru
          _
        // Predicated region
        $region53: #{tpu_custom_call.1} parent=47 // pred_check
          %p406 = pneg %p88
        $region54: #{tpu_custom_call.1} parent=47 // pred_check_branch
          %408 = sbr.rel (%p406) target = $region56
        $region55: #{tpu_custom_call.1} parent=47 // pred_region
          %s409 = sand.u32 %s28, 1
          %s410 = scalar_lea.sflag [#allocation9], %s409
          %s411 = sand.u32 %s78, 1
          %s412 = smul.addr %s411, 4
          %s413 = scalar_lea.vmem [#allocation8], %s412
          %s415 = ssub.s32 64, 64
          %416 = vsyncadd %s410, %s415
          %s417 = smul.addr %s35, 64
          %s418 = scalar_lea.hbm %s1, %s417
          %s420 = sshll.u32 %s413, 4
          %s421 = int_to_ptr.vmem [resolvable:$true] %s420
          %423 = dma.hbm_to_vmem [thread:$0]  %s418, 64, %s421, %s410
        $region56: #{tpu_custom_call.1} parent=47 // pred_fallthru
          _
        // Predicated region
        $region57: #{tpu_custom_call.1} parent=47 // pred_check
          %p424 = pneg %p114
        $region58: #{tpu_custom_call.1} parent=47 // pred_check_branch
          %426 = sbr.rel (%p424) target = $region60
        $region59: #{tpu_custom_call.1} parent=47 // pred_region
          %s427 = sand.u32 %s28, 1
          %s428 = scalar_lea.sflag [#allocation9], %s427
          %s429 = sand.u32 %s104, 1
          %s430 = smul.addr %s429, 4
          %s431 = scalar_lea.vmem [#allocation10], %s430
          %s433 = ssub.s32 64, 64
          %434 = vsyncadd %s428, %s433
          %s435 = smul.addr %s35, 64
          %s436 = scalar_lea.hbm %s2, %s435
          %s438 = sshll.u32 %s431, 4
          %s439 = int_to_ptr.vmem [resolvable:$true] %s438
          %441 = dma.hbm_to_vmem [thread:$0]  %s436, 64, %s439, %s428
        $region60: #{tpu_custom_call.1} parent=47 // pred_fallthru
          _
      $region48: #{tpu_custom_call.1} parent=5 // pred_fallthru
        _
      %p442 = scmp.le.s32.totalorder 1, %s28
      %p443 = scmp.lt.s32.totalorder %s28, 3
      %p444 = pnand %p442, %p443
      %p445 = pneg %p444
      // Predicated region
      $region61: #{tpu_custom_call.1} parent=5 // pred_check
        _
      $region62: #{tpu_custom_call.1} parent=5 // pred_check_branch
        %447 = sbr.rel (%p444) target = $region64
      $region63: #{tpu_custom_call.1} parent=5 // pred_region
        %s448 = ssub.s32 %s28, 1
        %s449 = sand.u32 %s55, 1
        %s450 = scalar_lea.sflag [#allocation6], %s449
        %s451 = sand.u32 %s55, 1
        %s452 = smul.addr %s451, 4
        %s453 = scalar_lea.vmem [#allocation5], %s452
        // Predicated region
        $region65: #{tpu_custom_call.1} parent=63 // pred_check
          %p454 = pneg %p68
        $region66: #{tpu_custom_call.1} parent=63 // pred_check_branch
          %456 = sbr.rel (%p454) target = $region68
        $region67: #{tpu_custom_call.1} parent=63 // pred_region
          %457 = dma.done %s450, 64
        $region68: #{tpu_custom_call.1} parent=63 // pred_fallthru
          _
        %s458 = sand.u32 %s33, 1
        %s459 = scalar_lea.sflag [#allocation9], %s458
        %s460 = sand.u32 %s81, 1
        %s461 = smul.addr %s460, 4
        %s462 = scalar_lea.vmem [#allocation8], %s461
        // Predicated region
        $region69: #{tpu_custom_call.1} parent=63 // pred_check
          %p463 = pneg %p94
        $region70: #{tpu_custom_call.1} parent=63 // pred_check_branch
          %465 = sbr.rel (%p463) target = $region72
        $region71: #{tpu_custom_call.1} parent=63 // pred_region
          %466 = dma.done %s459, 64
        $region72: #{tpu_custom_call.1} parent=63 // pred_fallthru
          _
        %s467 = sand.u32 %s33, 1
        %s468 = scalar_lea.sflag [#allocation9], %s467
        %s469 = sand.u32 %s107, 1
        %s470 = smul.addr %s469, 4
        %s471 = scalar_lea.vmem [#allocation10], %s470
        // Predicated region
        $region73: #{tpu_custom_call.1} parent=63 // pred_check
          %p472 = pneg %p120
        $region74: #{tpu_custom_call.1} parent=63 // pred_check_branch
          %474 = sbr.rel (%p472) target = $region76
        $region75: #{tpu_custom_call.1} parent=63 // pred_region
          %475 = dma.done %s468, 64
        $region76: #{tpu_custom_call.1} parent=63 // pred_fallthru
          _
        // Predicated region
        $region77: #{tpu_custom_call.1} parent=63 // pred_check
          %p476 = pneg %p141
        $region78: #{tpu_custom_call.1} parent=63 // pred_check_branch
          %478 = sbr.rel (%p476) target = $region80
        $region79: #{tpu_custom_call.1} parent=63 // pred_region
          %479 = dma.done [#allocation12], 256
        $region80: #{tpu_custom_call.1} parent=63 // pred_fallthru
          _
        // Predicated region
        $region81: #{tpu_custom_call.1} parent=63 // pred_check
          %p480 = pneg %p225
        $region82: #{tpu_custom_call.1} parent=63 // pred_check_branch
          %482 = sbr.rel (%p480) target = $region84
        $region83: #{tpu_custom_call.1} parent=63 // pred_region
          %483 = dma.done [#allocation12], 256
        $region84: #{tpu_custom_call.1} parent=63 // pred_fallthru
          _
        // Predicated region
        $region85: #{tpu_custom_call.1} parent=63 // pred_check
          %p484 = pneg %p246
        $region86: #{tpu_custom_call.1} parent=63 // pred_check_branch
          %486 = sbr.rel (%p484) target = $region88
        $region87: #{tpu_custom_call.1} parent=63 // pred_region
          %487 = dma.done [#allocation15], 16
        $region88: #{tpu_custom_call.1} parent=63 // pred_fallthru
          _
        %s488 = sand.u32 %s55, 1
        %s489 = scalar_lea.sflag [#allocation6], %s488
        %s490 = sand.u32 %s55, 1
        %s491 = smul.addr %s490, 4
        %s492 = scalar_lea.vmem [#allocation5], %s491
        %p493 = pneg %p68
        %p494 = pneg %p65
        %s495 = sand.u32 %s33, 1
        %s496 = scalar_lea.sflag [#allocation9], %s495
        %s497 = sand.u32 %s81, 1
        %s498 = smul.addr %s497, 4
        %s499 = scalar_lea.vmem [#allocation8], %s498
        %p500 = pneg %p94
        %p501 = pneg %p91
        %s502 = sand.u32 %s33, 1
        %s503 = scalar_lea.sflag [#allocation9], %s502
        %s504 = sand.u32 %s107, 1
        %s505 = smul.addr %s504, 4
        %s506 = scalar_lea.vmem [#allocation10], %s505
        %p507 = pneg %p120
        %p508 = pneg %p117
        %p509 = pneg %p141
        %p510 = pneg %p138
        %p511 = pneg %p162
        %p512 = pneg %p159
        %p513 = pneg %p183
        %p514 = pneg %p180
        %p515 = pneg %p204
        %p516 = pneg %p201
        %p517 = pneg %p225
        %p518 = pneg %p222
        %p519 = pneg %p246
        %p520 = pneg %p243
        %p521 = pneg %p267
        %p522 = pneg %p264
        %p523 = pneg %p288
        %p524 = pneg %p285
        %p525 = pneg %p316
        %p526 = pneg %p313
        %s527 = sand.u32 %s303, 1
        %s528 = scalar_lea.sflag [#allocation7], %s527
        %s529 = sand.u32 %s303, 1
        %s530 = smul.addr %s529, 8
        %s531 = scalar_lea.vmem [#allocation16], %s530
        %p533 = scmp.eq.s32.totalorder %s38, 0
        // Predicated region
        $region89: #{tpu_custom_call.1} parent=63 // pred_check
          %p534 = pneg %p533
        $region90: #{tpu_custom_call.1} parent=63 // pred_check_branch
          %536 = sbr.rel (%p534) target = $region92
        $region91: #{tpu_custom_call.1} parent=63 // pred_region
          %v537 = vld [vmem:[%s462] sm:$0xf]
          %v538 = vld [vmem:[%s5] sm:$0xf]
          %v539 = vld [vmem:[%s5 + $0x4] sm:$0xf]
          %v540 = vld [vmem:[%s5 + $0x8] sm:$0xf]
          %v541 = vld [vmem:[%s5 + $0xc] sm:$0xf]
          %v542 = vld [vmem:[%s6] sm:$0x1]
          %v544 = vlaneseq
          %v545 = vshrl.u32 %v544, 7
          %v546 = vsub.s32 0, %v545
          %v547 = vrot.slane %v542, %v546
          %v553 = vunpack.c.l.b16 %v538
          %v554 = vunpack.c.l.b16 %v539
          %v555 = vunpack.c.l.b16 %v540
          %v556 = vunpack.c.l.b16 %v541
          %v557 = vpack.c.b16 %v554, %v553
          %v558 = vpack.c.b16 %v556, %v555
          %vm561 = vcmask 261120
          %v563 = vsel %vm561, %v537, 0
          %565 = vmatprep.subr.bf16.mxu0 0
          %566 = vmatpush1.bf16.msra.mxu0 %v557
          %567 = vmatprep.subr.bf16.mxu0 0
          %568 = vmatpush1.bf16.msra.mxu0 %v558
          %569 = vmatprep.subr.bf16.mxu0 0
          %570 = vmatpush1.bf16.msra.mxu0 0
          %571 = vmatprep.subr.bf16.mxu0 0
          %572 = vmatpush1.bf16.msra.mxu0 0
          %573 = vmatprep.subr.bf16.mxu0 0
          %574 = vmatpush1.bf16.msra.mxu0 0
          %575 = vmatprep.subr.bf16.mxu0 0
          %576 = vmatpush1.bf16.msra.mxu0 0
          %577 = vmatprep.subr.bf16.mxu0 0
          %578 = vmatpush1.bf16.msra.mxu0 0
          %579 = vmatprep.subr.bf16.mxu0 0
          %580 = vmatpush1.bf16.msra.mxu0 0
          %581 = vmatprep.subr.bf16.mxu0 0
          %582 = vmatpush1.bf16.msra.mxu0 0
          %583 = vmatprep.subr.bf16.mxu0 0
          %584 = vmatpush1.bf16.msra.mxu0 0
          %585 = vmatprep.subr.bf16.mxu0 0
          %586 = vmatpush1.bf16.msra.mxu0 0
          %587 = vmatprep.subr.bf16.mxu0 0
          %588 = vmatpush1.bf16.msra.mxu0 0
          %589 = vmatprep.subr.bf16.mxu0 0
          %590 = vmatpush1.bf16.msra.mxu0 0
          %591 = vmatprep.subr.bf16.mxu0 0
          %592 = vmatpush1.bf16.msra.mxu0 0
          %593 = vmatprep.subr.bf16.mxu0 0
          %594 = vmatpush1.bf16.msra.mxu0 0
          %595 = vmatprep.subr.bf16.mxu0 0
          %596 = vmatpush1.bf16.msra.mxu0 0
          %597 = vmatprep.mubr.bf16.mxu0 0
          %598 = vmatmul.mubr.bf16.gmra.mrb[0].mxu0 %v563
          %v599 = vpop.f32.mrb[0].mxu0
          %v600 = vadd.f32 %v547, %v599
          %v601 = vpop.f32.mrb[0].mxu0
          %v602 = vpop.f32.mrb[0].mxu0
          %v603 = vpop.f32.mrb[0].mxu0
          %604 = vdwg.mxu0
          %v605 = vld [vmem:[%s471] sm:$0xf]
          %v606 = vld [vmem:[#allocation13] sm:$0xf]
          %v607 = vld [vmem:[#allocation13 + $0x4] sm:$0xf]
          %v608 = vld [vmem:[#allocation13 + $0x8] sm:$0xf]
          %v609 = vld [vmem:[#allocation13 + $0xc] sm:$0xf]
          %v610 = vld [vmem:[#allocation14] sm:$0x1]
          %v612 = vlaneseq
          %v613 = vshrl.u32 %v612, 7
          %v614 = vsub.s32 0, %v613
          %v615 = vrot.slane %v610, %v614
          %v621 = vunpack.c.l.b16 %v606
          %v622 = vunpack.c.l.b16 %v607
          %v623 = vunpack.c.l.b16 %v608
          %v624 = vunpack.c.l.b16 %v609
          %v625 = vpack.c.b16 %v622, %v621
          %v626 = vpack.c.b16 %v624, %v623
          %v630 = vsel %vm561, %v605, 0
          %632 = vmatprep.subr.bf16.mxu0 0
          %633 = vmatpush1.bf16.msra.mxu0 %v625
          %634 = vmatprep.subr.bf16.mxu0 0
          %635 = vmatpush1.bf16.msra.mxu0 %v626
          %636 = vmatprep.subr.bf16.mxu0 0
          %637 = vmatpush1.bf16.msra.mxu0 0
          %638 = vmatprep.subr.bf16.mxu0 0
          %639 = vmatpush1.bf16.msra.mxu0 0
          %640 = vmatprep.subr.bf16.mxu0 0
          %641 = vmatpush1.bf16.msra.mxu0 0
          %642 = vmatprep.subr.bf16.mxu0 0
          %643 = vmatpush1.bf16.msra.mxu0 0
          %644 = vmatprep.subr.bf16.mxu0 0
          %645 = vmatpush1.bf16.msra.mxu0 0
          %646 = vmatprep.subr.bf16.mxu0 0
          %647 = vmatpush1.bf16.msra.mxu0 0
          %648 = vmatprep.subr.bf16.mxu0 0
          %649 = vmatpush1.bf16.msra.mxu0 0
          %650 = vmatprep.subr.bf16.mxu0 0
          %651 = vmatpush1.bf16.msra.mxu0 0
          %652 = vmatprep.subr.bf16.mxu0 0
          %653 = vmatpush1.bf16.msra.mxu0 0
          %654 = vmatprep.subr.bf16.mxu0 0
          %655 = vmatpush1.bf16.msra.mxu0 0
          %656 = vmatprep.subr.bf16.mxu0 0
          %657 = vmatpush1.bf16.msra.mxu0 0
          %658 = vmatprep.subr.bf16.mxu0 0
          %659 = vmatpush1.bf16.msra.mxu0 0
          %660 = vmatprep.subr.bf16.mxu0 0
          %661 = vmatpush1.bf16.msra.mxu0 0
          %662 = vmatprep.subr.bf16.mxu0 0
          %663 = vmatpush1.bf16.msra.mxu0 0
          %664 = vmatprep.mubr.bf16.mxu0 0
          %665 = vmatmul.mubr.bf16.gmra.mrb[0].mxu0 %v630
          %v666 = vpop.f32.mrb[0].mxu0
          %v667 = vadd.f32 %v615, %v666
          %v668 = vpop.f32.mrb[0].mxu0
          %v669 = vpop.f32.mrb[0].mxu0
          %v670 = vpop.f32.mrb[0].mxu0
          %671 = vdwg.mxu0
          %v672 = vpack.c.bf16 %v600, %v600
          %vm673 = vcmask 60416
          %674 = vst.msk [vmem:[#allocation2] sm:$0xf] %vm673, %v672
          %v675 = vpack.c.bf16 %v667, %v667
          %676 = vst.msk [vmem:[#allocation3] sm:$0xf] %vm673, %v675
          %v678 = vunpack.c.l.b16 %v672
          %v679 = vpack.c.b16 %v678, %v678
          %680 = vrot.lane.b32.xlu0 %v679, 120
          %v681 = vpop.permute.xlu0 %680
          %s683 = scalar_lea.vmem [#allocation2], 4
          %684 = vst.msk [vmem:[%s683] sm:$0xf] %vm673, %v681
          %v686 = vunpack.c.l.b16 %v675
          %v687 = vpack.c.b16 %v686, %v686
          %688 = vrot.lane.b32.xlu0 %v687, 120
          %v689 = vpop.permute.xlu0 %688
          %s691 = scalar_lea.vmem [#allocation3], 4
          %692 = vst.msk [vmem:[%s691] sm:$0xf] %vm673, %v689
          %693 = vrot.lane.b32.xlu0 %v679, 112
          %v694 = vpop.permute.xlu0 %693
          %s696 = scalar_lea.vmem [#allocation2], 8
          %697 = vst.msk [vmem:[%s696] sm:$0xf] %vm673, %v694
          %698 = vrot.lane.b32.xlu0 %v687, 112
          %v699 = vpop.permute.xlu0 %698
          %s701 = scalar_lea.vmem [#allocation3], 8
          %702 = vst.msk [vmem:[%s701] sm:$0xf] %vm673, %v699
          %703 = vrot.lane.b32.xlu0 %v679, 104
          %v704 = vpop.permute.xlu0 %703
          %s706 = scalar_lea.vmem [#allocation2], 12
          %707 = vst.msk [vmem:[%s706] sm:$0xf] %vm673, %v704
          %708 = vrot.lane.b32.xlu0 %v687, 104
          %v709 = vpop.permute.xlu0 %708
          %s711 = scalar_lea.vmem [#allocation3], 12
          %712 = vst.msk [vmem:[%s711] sm:$0xf] %vm673, %v709
        $region92: #{tpu_custom_call.1} parent=63 // pred_fallthru
          _
        %v713 = vld [vmem:[%s453] sm:$0xf]
        %v714 = vld [vmem:[#allocation11] sm:$0xf]
        %v715 = vld [vmem:[#allocation11 + $0x4] sm:$0xf]
        %v716 = vld [vmem:[#allocation11 + $0x8] sm:$0xf]
        %v717 = vld [vmem:[#allocation11 + $0xc] sm:$0xf]
        %v718 = vld [vmem:[%s4] sm:$0x1]
        %v720 = vlaneseq
        %v721 = vshrl.u32 %v720, 7
        %v722 = vsub.s32 0, %v721
        %v723 = vrot.slane %v718, %v722
        %v729 = vunpack.c.l.b16 %v714
        %v730 = vunpack.c.l.b16 %v715
        %v731 = vunpack.c.l.b16 %v716
        %v732 = vunpack.c.l.b16 %v717
        %v733 = vpack.c.b16 %v730, %v729
        %v734 = vpack.c.b16 %v732, %v731
        %vm737 = vcmask 261120
        %v739 = vsel %vm737, %v713, 0
        %741 = vmatprep.subr.bf16.mxu0 0
        %742 = vmatpush1.bf16.msra.mxu0 %v733
        %743 = vmatprep.subr.bf16.mxu0 0
        %744 = vmatpush1.bf16.msra.mxu0 %v734
        %745 = vmatprep.subr.bf16.mxu0 0
        %746 = vmatpush1.bf16.msra.mxu0 0
        %747 = vmatprep.subr.bf16.mxu0 0
        %748 = vmatpush1.bf16.msra.mxu0 0
        %749 = vmatprep.subr.bf16.mxu0 0
        %750 = vmatpush1.bf16.msra.mxu0 0
        %751 = vmatprep.subr.bf16.mxu0 0
        %752 = vmatpush1.bf16.msra.mxu0 0
        %753 = vmatprep.subr.bf16.mxu0 0
        %754 = vmatpush1.bf16.msra.mxu0 0
        %755 = vmatprep.subr.bf16.mxu0 0
        %756 = vmatpush1.bf16.msra.mxu0 0
        %757 = vmatprep.subr.bf16.mxu0 0
        %758 = vmatpush1.bf16.msra.mxu0 0
        %759 = vmatprep.subr.bf16.mxu0 0
        %760 = vmatpush1.bf16.msra.mxu0 0
        %761 = vmatprep.subr.bf16.mxu0 0
        %762 = vmatpush1.bf16.msra.mxu0 0
        %763 = vmatprep.subr.bf16.mxu0 0
        %764 = vmatpush1.bf16.msra.mxu0 0
        %765 = vmatprep.subr.bf16.mxu0 0
        %766 = vmatpush1.bf16.msra.mxu0 0
        %767 = vmatprep.subr.bf16.mxu0 0
        %768 = vmatpush1.bf16.msra.mxu0 0
        %769 = vmatprep.subr.bf16.mxu0 0
        %770 = vmatpush1.bf16.msra.mxu0 0
        %771 = vmatprep.subr.bf16.mxu0 0
        %772 = vmatpush1.bf16.msra.mxu0 0
        %773 = vmatprep.mubr.bf16.mxu0 0
        %774 = vmatmul.mubr.bf16.gmra.mrb[0].mxu0 %v739
        %v775 = vpop.f32.mrb[0].mxu0
        %v776 = vadd.f32 %v723, %v775
        %v777 = vpop.f32.mrb[0].mxu0
        %v778 = vpop.f32.mrb[0].mxu0
        %v779 = vpop.f32.mrb[0].mxu0
        %780 = vdwg.mxu0
        %v781 = vpack.c.bf16 %v776, %v776
        %v782 = vld [vmem:[#allocation2] sm:$0xf]
        %v783 = vld [vmem:[#allocation3] sm:$0xf]
        %vm784 = vcmask 64512
        %v786 = vsel %vm784, %v781, 0
        %v789 = vsel %vm784, %v782, 0
        %791 = vmatprep.subr.bf16.mxu0 0
        %792 = vmatpush1.bf16.xpose.msra.mxu0 %v789
        %793 = vmatprep.subr.bf16.mxu0 0
        %794 = vmatpush1.bf16.xpose.msra.mxu0 0
        %795 = vmatprep.subr.bf16.mxu0 0
        %796 = vmatpush1.bf16.xpose.msra.mxu0 0
        %797 = vmatprep.subr.bf16.mxu0 0
        %798 = vmatpush1.bf16.xpose.msra.mxu0 0
        %799 = vmatprep.subr.bf16.mxu0 0
        %800 = vmatpush1.bf16.xpose.msra.mxu0 0
        %801 = vmatprep.subr.bf16.mxu0 0
        %802 = vmatpush1.bf16.xpose.msra.mxu0 0
        %803 = vmatprep.subr.bf16.mxu0 0
        %804 = vmatpush1.bf16.xpose.msra.mxu0 0
        %805 = vmatprep.subr.bf16.mxu0 0
        %806 = vmatpush1.bf16.xpose.msra.mxu0 0
        %807 = vmatprep.subr.bf16.mxu0 0
        %808 = vmatpush1.bf16.xpose.msra.mxu0 0
        %809 = vmatprep.subr.bf16.mxu0 0
        %810 = vmatpush1.bf16.xpose.msra.mxu0 0
        %811 = vmatprep.subr.bf16.mxu0 0
        %812 = vmatpush1.bf16.xpose.msra.mxu0 0
        %813 = vmatprep.subr.bf16.mxu0 0
        %814 = vmatpush1.bf16.xpose.msra.mxu0 0
        %815 = vmatprep.subr.bf16.mxu0 0
        %816 = vmatpush1.bf16.xpose.msra.mxu0 0
        %817 = vmatprep.subr.bf16.mxu0 0
        %818 = vmatpush1.bf16.xpose.msra.mxu0 0
        %819 = vmatprep.subr.bf16.mxu0 0
        %820 = vmatpush1.bf16.xpose.msra.mxu0 0
        %821 = vmatprep.subr.bf16.mxu0 0
        %822 = vmatpush1.bf16.xpose.msra.mxu0 0
        %823 = vmatprep.mubr.bf16.mxu0 0
        %824 = vmatmul.mubr.bf16.gmra.mrb[0].mxu0 %v786
        %v825 = vpop.f32.mrb[0].mxu0
        %v826 = vadd.f32 0.0, %v825
        %v827 = vpop.f32.mrb[0].mxu0
        %v828 = vpop.f32.mrb[0].mxu0
        %v829 = vpop.f32.mrb[0].mxu0
        %830 = vdwg.mxu0
        %v831 = vsel %vm784, %v826, -inf
        %832 = vmax.xlane.f32.xlu0 %v831
        %v833 = vpop.xlane.xlu0 %832
        %v834 = vsub.f32 %v826, %v833
        %v835 = vmul.f32 %v834, 1.442695
        %v836 = vpow.pop %v835
        %v837 = vsel %vm784, %v836, 0.0
        %838 = vadd.xlane.f32.xlu0 %v837
        %v839 = vpop.xlane.xlu0 %838
        %v840 = vpack.c.bf16 %v836, %v836
        %v842 = vsel %vm784, %v840, 0
        %vm844 = vcmask 1043456
        %v846 = vsel %vm844, %v783, 0
        %848 = vmatprep.subr.bf16.mxu0 0
        %849 = vmatpush1.bf16.msra.mxu0 %v846
        %850 = vmatprep.subr.bf16.mxu0 0
        %851 = vmatpush1.bf16.msra.mxu0 0
        %852 = vmatprep.subr.bf16.mxu0 0
        %853 = vmatpush1.bf16.msra.mxu0 0
        %854 = vmatprep.subr.bf16.mxu0 0
        %855 = vmatpush1.bf16.msra.mxu0 0
        %856 = vmatprep.subr.bf16.mxu0 0
        %857 = vmatpush1.bf16.msra.mxu0 0
        %858 = vmatprep.subr.bf16.mxu0 0
        %859 = vmatpush1.bf16.msra.mxu0 0
        %860 = vmatprep.subr.bf16.mxu0 0
        %861 = vmatpush1.bf16.msra.mxu0 0
        %862 = vmatprep.subr.bf16.mxu0 0
        %863 = vmatpush1.bf16.msra.mxu0 0
        %864 = vmatprep.subr.bf16.mxu0 0
        %865 = vmatpush1.bf16.msra.mxu0 0
        %866 = vmatprep.subr.bf16.mxu0 0
        %867 = vmatpush1.bf16.msra.mxu0 0
        %868 = vmatprep.subr.bf16.mxu0 0
        %869 = vmatpush1.bf16.msra.mxu0 0
        %870 = vmatprep.subr.bf16.mxu0 0
        %871 = vmatpush1.bf16.msra.mxu0 0
        %872 = vmatprep.subr.bf16.mxu0 0
        %873 = vmatpush1.bf16.msra.mxu0 0
        %874 = vmatprep.subr.bf16.mxu0 0
        %875 = vmatpush1.bf16.msra.mxu0 0
        %876 = vmatprep.subr.bf16.mxu0 0
        %877 = vmatpush1.bf16.msra.mxu0 0
        %878 = vmatprep.subr.bf16.mxu0 0
        %879 = vmatpush1.bf16.msra.mxu0 0
        %880 = vmatprep.mubr.bf16.mxu0 0
        %881 = vmatmul.mubr.bf16.gmra.mrb[0].mxu0 %v842
        %v882 = vpop.f32.mrb[0].mxu0
        %v883 = vadd.f32 0.0, %v882
        %v884 = vpop.f32.mrb[0].mxu0
        %v885 = vpop.f32.mrb[0].mxu0
        %v886 = vpop.f32.mrb[0].mxu0
        %887 = vdwg.mxu0
        %v888 = vrcp.pop %v839
        %v889 = vmul.f32 %v883, %v888
        %v890 = vpack.c.bf16 %v889, %v889
        %vm891 = vcmask 60416
        %892 = vst.msk [vmem:[#allocation4] sm:$0xf] %vm891, %v890
        %s893 = scalar_lea.vmem [#allocation2], 4
        %v894 = vld [vmem:[%s893] sm:$0xf]
        %s895 = scalar_lea.vmem [#allocation3], 4
        %v896 = vld [vmem:[%s895] sm:$0xf]
        %898 = vrot.lane.b32.xlu0 %v781, 120
        %v899 = vpop.permute.xlu0 %898
        %v901 = vsel %vm784, %v899, 0
        %v904 = vsel %vm784, %v894, 0
        %906 = vmatprep.subr.bf16.mxu0 0
        %907 = vmatpush1.bf16.xpose.msra.mxu0 %v904
        %908 = vmatprep.subr.bf16.mxu0 0
        %909 = vmatpush1.bf16.xpose.msra.mxu0 0
        %910 = vmatprep.subr.bf16.mxu0 0
        %911 = vmatpush1.bf16.xpose.msra.mxu0 0
        %912 = vmatprep.subr.bf16.mxu0 0
        %913 = vmatpush1.bf16.xpose.msra.mxu0 0
        %914 = vmatprep.subr.bf16.mxu0 0
        %915 = vmatpush1.bf16.xpose.msra.mxu0 0
        %916 = vmatprep.subr.bf16.mxu0 0
        %917 = vmatpush1.bf16.xpose.msra.mxu0 0
        %918 = vmatprep.subr.bf16.mxu0 0
        %919 = vmatpush1.bf16.xpose.msra.mxu0 0
        %920 = vmatprep.subr.bf16.mxu0 0
        %921 = vmatpush1.bf16.xpose.msra.mxu0 0
        %922 = vmatprep.subr.bf16.mxu0 0
        %923 = vmatpush1.bf16.xpose.msra.mxu0 0
        %924 = vmatprep.subr.bf16.mxu0 0
        %925 = vmatpush1.bf16.xpose.msra.mxu0 0
        %926 = vmatprep.subr.bf16.mxu0 0
        %927 = vmatpush1.bf16.xpose.msra.mxu0 0
        %928 = vmatprep.subr.bf16.mxu0 0
        %929 = vmatpush1.bf16.xpose.msra.mxu0 0
        %930 = vmatprep.subr.bf16.mxu0 0
        %931 = vmatpush1.bf16.xpose.msra.mxu0 0
        %932 = vmatprep.subr.bf16.mxu0 0
        %933 = vmatpush1.bf16.xpose.msra.mxu0 0
        %934 = vmatprep.subr.bf16.mxu0 0
        %935 = vmatpush1.bf16.xpose.msra.mxu0 0
        %936 = vmatprep.subr.bf16.mxu0 0
        %937 = vmatpush1.bf16.xpose.msra.mxu0 0
        %938 = vmatprep.mubr.bf16.mxu0 0
        %939 = vmatmul.mubr.bf16.gmra.mrb[0].mxu0 %v901
        %v940 = vpop.f32.mrb[0].mxu0
        %v941 = vadd.f32 0.0, %v940
        %v942 = vpop.f32.mrb[0].mxu0
        %v943 = vpop.f32.mrb[0].mxu0
        %v944 = vpop.f32.mrb[0].mxu0
        %945 = vdwg.mxu0
        %v946 = vsel %vm784, %v941, -inf
        %947 = vmax.xlane.f32.xlu0 %v946
        %v948 = vpop.xlane.xlu0 %947
        %v949 = vsub.f32 %v941, %v948
        %v950 = vmul.f32 %v949, 1.442695
        %v951 = vpow.pop %v950
        %v952 = vsel %vm784, %v951, 0.0
        %953 = vadd.xlane.f32.xlu0 %v952
        %v954 = vpop.xlane.xlu0 %953
        %v955 = vpack.c.bf16 %v951, %v951
        %v957 = vsel %vm784, %v955, 0
        %v960 = vsel %vm844, %v896, 0
        %962 = vmatprep.subr.bf16.mxu0 0
        %963 = vmatpush1.bf16.msra.mxu0 %v960
        %964 = vmatprep.subr.bf16.mxu0 0
        %965 = vmatpush1.bf16.msra.mxu0 0
        %966 = vmatprep.subr.bf16.mxu0 0
        %967 = vmatpush1.bf16.msra.mxu0 0
        %968 = vmatprep.subr.bf16.mxu0 0
        %969 = vmatpush1.bf16.msra.mxu0 0
        %970 = vmatprep.subr.bf16.mxu0 0
        %971 = vmatpush1.bf16.msra.mxu0 0
        %972 = vmatprep.subr.bf16.mxu0 0
        %973 = vmatpush1.bf16.msra.mxu0 0
        %974 = vmatprep.subr.bf16.mxu0 0
        %975 = vmatpush1.bf16.msra.mxu0 0
        %976 = vmatprep.subr.bf16.mxu0 0
        %977 = vmatpush1.bf16.msra.mxu0 0
        %978 = vmatprep.subr.bf16.mxu0 0
        %979 = vmatpush1.bf16.msra.mxu0 0
        %980 = vmatprep.subr.bf16.mxu0 0
        %981 = vmatpush1.bf16.msra.mxu0 0
        %982 = vmatprep.subr.bf16.mxu0 0
        %983 = vmatpush1.bf16.msra.mxu0 0
        %984 = vmatprep.subr.bf16.mxu0 0
        %985 = vmatpush1.bf16.msra.mxu0 0
        %986 = vmatprep.subr.bf16.mxu0 0
        %987 = vmatpush1.bf16.msra.mxu0 0
        %988 = vmatprep.subr.bf16.mxu0 0
        %989 = vmatpush1.bf16.msra.mxu0 0
        %990 = vmatprep.subr.bf16.mxu0 0
        %991 = vmatpush1.bf16.msra.mxu0 0
        %992 = vmatprep.subr.bf16.mxu0 0
        %993 = vmatpush1.bf16.msra.mxu0 0
        %994 = vmatprep.mubr.bf16.mxu0 0
        %995 = vmatmul.mubr.bf16.gmra.mrb[0].mxu0 %v957
        %v996 = vpop.f32.mrb[0].mxu0
        %v997 = vadd.f32 0.0, %v996
        %v998 = vpop.f32.mrb[0].mxu0
        %v999 = vpop.f32.mrb[0].mxu0
        %v1000 = vpop.f32.mrb[0].mxu0
        %1001 = vdwg.mxu0
        %v1002 = vrcp.pop %v954
        %v1003 = vmul.f32 %v997, %v1002
        %v1004 = vpack.c.bf16 %v1003, %v1003
        %v1006 = vunpack.c.l.b16 %v1004
        %v1007 = vpack.c.b16 %v1006, %v1006
        %1008 = vrot.lane.b32.xlu0 %v1007, 8
        %v1009 = vpop.permute.xlu0 %1008
        %vm1011 = vcmask 126016
        %1012 = vst.msk [vmem:[#allocation4] sm:$0xf] %vm1011, %v1009
        %s1013 = scalar_lea.vmem [#allocation2], 8
        %v1014 = vld [vmem:[%s1013] sm:$0xf]
        %s1015 = scalar_lea.vmem [#allocation3], 8
        %v1016 = vld [vmem:[%s1015] sm:$0xf]
        %1017 = vrot.lane.b32.xlu0 %v781, 112
        %v1018 = vpop.permute.xlu0 %1017
        %v1020 = vsel %vm784, %v1018, 0
        %v1023 = vsel %vm784, %v1014, 0
        %1025 = vmatprep.subr.bf16.mxu0 0
        %1026 = vmatpush1.bf16.xpose.msra.mxu0 %v1023
        %1027 = vmatprep.subr.bf16.mxu0 0
        %1028 = vmatpush1.bf16.xpose.msra.mxu0 0
        %1029 = vmatprep.subr.bf16.mxu0 0
        %1030 = vmatpush1.bf16.xpose.msra.mxu0 0
        %1031 = vmatprep.subr.bf16.mxu0 0
        %1032 = vmatpush1.bf16.xpose.msra.mxu0 0
        %1033 = vmatprep.subr.bf16.mxu0 0
        %1034 = vmatpush1.bf16.xpose.msra.mxu0 0
        %1035 = vmatprep.subr.bf16.mxu0 0
        %1036 = vmatpush1.bf16.xpose.msra.mxu0 0
        %1037 = vmatprep.subr.bf16.mxu0 0
        %1038 = vmatpush1.bf16.xpose.msra.mxu0 0
        %1039 = vmatprep.subr.bf16.mxu0 0
        %1040 = vmatpush1.bf16.xpose.msra.mxu0 0
        %1041 = vmatprep.subr.bf16.mxu0 0
        %1042 = vmatpush1.bf16.xpose.msra.mxu0 0
        %1043 = vmatprep.subr.bf16.mxu0 0
        %1044 = vmatpush1.bf16.xpose.msra.mxu0 0
        %1045 = vmatprep.subr.bf16.mxu0 0
        %1046 = vmatpush1.bf16.xpose.msra.mxu0 0
        %1047 = vmatprep.subr.bf16.mxu0 0
        %1048 = vmatpush1.bf16.xpose.msra.mxu0 0
        %1049 = vmatprep.subr.bf16.mxu0 0
        %1050 = vmatpush1.bf16.xpose.msra.mxu0 0
        %1051 = vmatprep.subr.bf16.mxu0 0
        %1052 = vmatpush1.bf16.xpose.msra.mxu0 0
        %1053 = vmatprep.subr.bf16.mxu0 0
        %1054 = vmatpush1.bf16.xpose.msra.mxu0 0
        %1055 = vmatprep.subr.bf16.mxu0 0
        %1056 = vmatpush1.bf16.xpose.msra.mxu0 0
        %1057 = vmatprep.mubr.bf16.mxu0 0
        %1058 = vmatmul.mubr.bf16.gmra.mrb[0].mxu0 %v1020
        %v1059 = vpop.f32.mrb[0].mxu0
        %v1060 = vadd.f32 0.0, %v1059
        %v1061 = vpop.f32.mrb[0].mxu0
        %v1062 = vpop.f32.mrb[0].mxu0
        %v1063 = vpop.f32.mrb[0].mxu0
        %1064 = vdwg.mxu0
        %v1065 = vsel %vm784, %v1060, -inf
        %1066 = vmax.xlane.f32.xlu0 %v1065
        %v1067 = vpop.xlane.xlu0 %1066
        %v1068 = vsub.f32 %v1060, %v1067
        %v1069 = vmul.f32 %v1068, 1.442695
        %v1070 = vpow.pop %v1069
        %v1071 = vsel %vm784, %v1070, 0.0
        %1072 = vadd.xlane.f32.xlu0 %v1071
        %v1073 = vpop.xlane.xlu0 %1072
        %v1074 = vpack.c.bf16 %v1070, %v1070
        %v1076 = vsel %vm784, %v1074, 0
        %v1079 = vsel %vm844, %v1016, 0
        %1081 = vmatprep.subr.bf16.mxu0 0
        %1082 = vmatpush1.bf16.msra.mxu0 %v1079
        %1083 = vmatprep.subr.bf16.mxu0 0
        %1084 = vmatpush1.bf16.msra.mxu0 0
        %1085 = vmatprep.subr.bf16.mxu0 0
        %1086 = vmatpush1.bf16.msra.mxu0 0
        %1087 = vmatprep.subr.bf16.mxu0 0
        %1088 = vmatpush1.bf16.msra.mxu0 0
        %1089 = vmatprep.subr.bf16.mxu0 0
        %1090 = vmatpush1.bf16.msra.mxu0 0
        %1091 = vmatprep.subr.bf16.mxu0 0
        %1092 = vmatpush1.bf16.msra.mxu0 0
        %1093 = vmatprep.subr.bf16.mxu0 0
        %1094 = vmatpush1.bf16.msra.mxu0 0
        %1095 = vmatprep.subr.bf16.mxu0 0
        %1096 = vmatpush1.bf16.msra.mxu0 0
        %1097 = vmatprep.subr.bf16.mxu0 0
        %1098 = vmatpush1.bf16.msra.mxu0 0
        %1099 = vmatprep.subr.bf16.mxu0 0
        %1100 = vmatpush1.bf16.msra.mxu0 0
        %1101 = vmatprep.subr.bf16.mxu0 0
        %1102 = vmatpush1.bf16.msra.mxu0 0
        %1103 = vmatprep.subr.bf16.mxu0 0
        %1104 = vmatpush1.bf16.msra.mxu0 0
        %1105 = vmatprep.subr.bf16.mxu0 0
        %1106 = vmatpush1.bf16.msra.mxu0 0
        %1107 = vmatprep.subr.bf16.mxu0 0
        %1108 = vmatpush1.bf16.msra.mxu0 0
        %1109 = vmatprep.subr.bf16.mxu0 0
        %1110 = vmatpush1.bf16.msra.mxu0 0
        %1111 = vmatprep.subr.bf16.mxu0 0
        %1112 = vmatpush1.bf16.msra.mxu0 0
        %1113 = vmatprep.mubr.bf16.mxu0 0
        %1114 = vmatmul.mubr.bf16.gmra.mrb[0].mxu0 %v1076
        %v1115 = vpop.f32.mrb[0].mxu0
        %v1116 = vadd.f32 0.0, %v1115
        %v1117 = vpop.f32.mrb[0].mxu0
        %v1118 = vpop.f32.mrb[0].mxu0
        %v1119 = vpop.f32.mrb[0].mxu0
        %1120 = vdwg.mxu0
        %v1121 = vrcp.pop %v1073
        %v1122 = vmul.f32 %v1116, %v1121
        %v1123 = vpack.c.bf16 %v1122, %v1122
        %v1125 = vunpack.c.l.b16 %v1123
        %v1126 = vpack.c.b16 %v1125, %v1125
        %1127 = vrot.lane.b32.xlu0 %v1126, 16
        %v1128 = vpop.permute.xlu0 %1127
        %vm1130 = vcmask 191616
        %1131 = vst.msk [vmem:[#allocation4] sm:$0xf] %vm1130, %v1128
        %s1132 = scalar_lea.vmem [#allocation2], 12
        %v1133 = vld [vmem:[%s1132] sm:$0xf]
        %s1134 = scalar_lea.vmem [#allocation3], 12
        %v1135 = vld [vmem:[%s1134] sm:$0xf]
        %1136 = vrot.lane.b32.xlu0 %v781, 104
        %v1137 = vpop.permute.xlu0 %1136
        %v1139 = vsel %vm784, %v1137, 0
        %v1142 = vsel %vm784, %v1133, 0
        %1144 = vmatprep.subr.bf16.mxu0 0
        %1145 = vmatpush1.bf16.xpose.msra.mxu0 %v1142
        %1146 = vmatprep.subr.bf16.mxu0 0
        %1147 = vmatpush1.bf16.xpose.msra.mxu0 0
        %1148 = vmatprep.subr.bf16.mxu0 0
        %1149 = vmatpush1.bf16.xpose.msra.mxu0 0
        %1150 = vmatprep.subr.bf16.mxu0 0
        %1151 = vmatpush1.bf16.xpose.msra.mxu0 0
        %1152 = vmatprep.subr.bf16.mxu0 0
        %1153 = vmatpush1.bf16.xpose.msra.mxu0 0
        %1154 = vmatprep.subr.bf16.mxu0 0
        %1155 = vmatpush1.bf16.xpose.msra.mxu0 0
        %1156 = vmatprep.subr.bf16.mxu0 0
        %1157 = vmatpush1.bf16.xpose.msra.mxu0 0
        %1158 = vmatprep.subr.bf16.mxu0 0
        %1159 = vmatpush1.bf16.xpose.msra.mxu0 0
        %1160 = vmatprep.subr.bf16.mxu0 0
        %1161 = vmatpush1.bf16.xpose.msra.mxu0 0
        %1162 = vmatprep.subr.bf16.mxu0 0
        %1163 = vmatpush1.bf16.xpose.msra.mxu0 0
        %1164 = vmatprep.subr.bf16.mxu0 0
        %1165 = vmatpush1.bf16.xpose.msra.mxu0 0
        %1166 = vmatprep.subr.bf16.mxu0 0
        %1167 = vmatpush1.bf16.xpose.msra.mxu0 0
        %1168 = vmatprep.subr.bf16.mxu0 0
        %1169 = vmatpush1.bf16.xpose.msra.mxu0 0
        %1170 = vmatprep.subr.bf16.mxu0 0
        %1171 = vmatpush1.bf16.xpose.msra.mxu0 0
        %1172 = vmatprep.subr.bf16.mxu0 0
        %1173 = vmatpush1.bf16.xpose.msra.mxu0 0
        %1174 = vmatprep.subr.bf16.mxu0 0
        %1175 = vmatpush1.bf16.xpose.msra.mxu0 0
        %1176 = vmatprep.mubr.bf16.mxu0 0
        %1177 = vmatmul.mubr.bf16.gmra.mrb[0].mxu0 %v1139
        %v1178 = vpop.f32.mrb[0].mxu0
        %v1179 = vadd.f32 0.0, %v1178
        %v1180 = vpop.f32.mrb[0].mxu0
        %v1181 = vpop.f32.mrb[0].mxu0
        %v1182 = vpop.f32.mrb[0].mxu0
        %1183 = vdwg.mxu0
        %v1184 = vsel %vm784, %v1179, -inf
        %1185 = vmax.xlane.f32.xlu0 %v1184
        %v1186 = vpop.xlane.xlu0 %1185
        %v1187 = vsub.f32 %v1179, %v1186
        %v1188 = vmul.f32 %v1187, 1.442695
        %v1189 = vpow.pop %v1188
        %v1190 = vsel %vm784, %v1189, 0.0
        %1191 = vadd.xlane.f32.xlu0 %v1190
        %v1192 = vpop.xlane.xlu0 %1191
        %v1193 = vpack.c.bf16 %v1189, %v1189
        %v1195 = vsel %vm784, %v1193, 0
        %v1198 = vsel %vm844, %v1135, 0
        %1200 = vmatprep.subr.bf16.mxu0 0
        %1201 = vmatpush1.bf16.msra.mxu0 %v1198
        %1202 = vmatprep.subr.bf16.mxu0 0
        %1203 = vmatpush1.bf16.msra.mxu0 0
        %1204 = vmatprep.subr.bf16.mxu0 0
        %1205 = vmatpush1.bf16.msra.mxu0 0
        %1206 = vmatprep.subr.bf16.mxu0 0
        %1207 = vmatpush1.bf16.msra.mxu0 0
        %1208 = vmatprep.subr.bf16.mxu0 0
        %1209 = vmatpush1.bf16.msra.mxu0 0
        %1210 = vmatprep.subr.bf16.mxu0 0
        %1211 = vmatpush1.bf16.msra.mxu0 0
        %1212 = vmatprep.subr.bf16.mxu0 0
        %1213 = vmatpush1.bf16.msra.mxu0 0
        %1214 = vmatprep.subr.bf16.mxu0 0
        %1215 = vmatpush1.bf16.msra.mxu0 0
        %1216 = vmatprep.subr.bf16.mxu0 0
        %1217 = vmatpush1.bf16.msra.mxu0 0
        %1218 = vmatprep.subr.bf16.mxu0 0
        %1219 = vmatpush1.bf16.msra.mxu0 0
        %1220 = vmatprep.subr.bf16.mxu0 0
        %1221 = vmatpush1.bf16.msra.mxu0 0
        %1222 = vmatprep.subr.bf16.mxu0 0
        %1223 = vmatpush1.bf16.msra.mxu0 0
        %1224 = vmatprep.subr.bf16.mxu0 0
        %1225 = vmatpush1.bf16.msra.mxu0 0
        %1226 = vmatprep.subr.bf16.mxu0 0
        %1227 = vmatpush1.bf16.msra.mxu0 0
        %1228 = vmatprep.subr.bf16.mxu0 0
        %1229 = vmatpush1.bf16.msra.mxu0 0
        %1230 = vmatprep.subr.bf16.mxu0 0
        %1231 = vmatpush1.bf16.msra.mxu0 0
        %1232 = vmatprep.mubr.bf16.mxu0 0
        %1233 = vmatmul.mubr.bf16.gmra.mrb[0].mxu0 %v1195
        %v1234 = vpop.f32.mrb[0].mxu0
        %v1235 = vadd.f32 0.0, %v1234
        %v1236 = vpop.f32.mrb[0].mxu0
        %v1237 = vpop.f32.mrb[0].mxu0
        %v1238 = vpop.f32.mrb[0].mxu0
        %1239 = vdwg.mxu0
        %v1240 = vrcp.pop %v1192
        %v1241 = vmul.f32 %v1235, %v1240
        %v1242 = vpack.c.bf16 %v1241, %v1241
        %v1244 = vunpack.c.l.b16 %v1242
        %v1245 = vpack.c.b16 %v1244, %v1244
        %1246 = vrot.lane.b32.xlu0 %v1245, 24
        %v1247 = vpop.permute.xlu0 %1246
        %vm1249 = vcmask 257216
        %1250 = vst.msk [vmem:[#allocation4] sm:$0xf] %vm1249, %v1247
        %v1251 = vld [vmem:[#allocation4] sm:$0xf]
        %v1252 = vld [vmem:[%s9] sm:$0xf]
        %v1253 = vld [vmem:[%s9 + $0x4] sm:$0xf]
        %v1254 = vld [vmem:[%s9 + $0x8] sm:$0xf]
        %v1255 = vld [vmem:[%s9 + $0xc] sm:$0xf]
        %v1256 = vld [vmem:[%s10] sm:$0x1]
        %v1258 = vlaneseq
        %v1259 = vshrl.u32 %v1258, 7
        %v1260 = vsub.s32 0, %v1259
        %v1261 = vrot.slane %v1256, %v1260
        %v1267 = vunpack.c.l.b16 %v1252
        %v1268 = vunpack.c.l.b16 %v1253
        %v1269 = vunpack.c.l.b16 %v1254
        %v1270 = vunpack.c.l.b16 %v1255
        %v1271 = vpack.c.b16 %v1268, %v1267
        %v1272 = vpack.c.b16 %v1270, %v1269
        %v1276 = vsel %vm737, %v1251, 0
        %1278 = vmatprep.subr.bf16.mxu0 0
        %1279 = vmatpush1.bf16.msra.mxu0 %v1271
        %1280 = vmatprep.subr.bf16.mxu0 0
        %1281 = vmatpush1.bf16.msra.mxu0 %v1272
        %1282 = vmatprep.subr.bf16.mxu0 0
        %1283 = vmatpush1.bf16.msra.mxu0 0
        %1284 = vmatprep.subr.bf16.mxu0 0
        %1285 = vmatpush1.bf16.msra.mxu0 0
        %1286 = vmatprep.subr.bf16.mxu0 0
        %1287 = vmatpush1.bf16.msra.mxu0 0
        %1288 = vmatprep.subr.bf16.mxu0 0
        %1289 = vmatpush1.bf16.msra.mxu0 0
        %1290 = vmatprep.subr.bf16.mxu0 0
        %1291 = vmatpush1.bf16.msra.mxu0 0
        %1292 = vmatprep.subr.bf16.mxu0 0
        %1293 = vmatpush1.bf16.msra.mxu0 0
        %1294 = vmatprep.subr.bf16.mxu0 0
        %1295 = vmatpush1.bf16.msra.mxu0 0
        %1296 = vmatprep.subr.bf16.mxu0 0
        %1297 = vmatpush1.bf16.msra.mxu0 0
        %1298 = vmatprep.subr.bf16.mxu0 0
        %1299 = vmatpush1.bf16.msra.mxu0 0
        %1300 = vmatprep.subr.bf16.mxu0 0
        %1301 = vmatpush1.bf16.msra.mxu0 0
        %1302 = vmatprep.subr.bf16.mxu0 0
        %1303 = vmatpush1.bf16.msra.mxu0 0
        %1304 = vmatprep.subr.bf16.mxu0 0
        %1305 = vmatpush1.bf16.msra.mxu0 0
        %1306 = vmatprep.subr.bf16.mxu0 0
        %1307 = vmatpush1.bf16.msra.mxu0 0
        %1308 = vmatprep.subr.bf16.mxu0 0
        %1309 = vmatpush1.bf16.msra.mxu0 0
        %1310 = vmatprep.mubr.bf16.mxu0 0
        %1311 = vmatmul.mubr.bf16.gmra.mrb[0].mxu0 %v1276
        %v1312 = vpop.f32.mrb[0].mxu0
        %v1313 = vadd.f32 %v1261, %v1312
        %v1314 = vpop.f32.mrb[0].mxu0
        %v1315 = vpop.f32.mrb[0].mxu0
        %v1316 = vpop.f32.mrb[0].mxu0
        %1317 = vdwg.mxu0
        %1318 = vst.msk [vmem:[%s531] sm:$0xff] %vm737, %v1313
        %s1319 = sand.u32 %s303, 1
        %s1320 = scalar_lea.sflag [#allocation7], %s1319
        %s1321 = sand.u32 %s303, 1
        %s1322 = smul.addr %s1321, 8
        %s1323 = scalar_lea.vmem [#allocation16], %s1322
        // Predicated region
        $region93: #{tpu_custom_call.1} parent=63 // pred_check
          %p1324 = pneg %p313
        $region94: #{tpu_custom_call.1} parent=63 // pred_check_branch
          %1326 = sbr.rel (%p1324) target = $region96
        $region95: #{tpu_custom_call.1} parent=63 // pred_region
          %s1328 = ssub.s32 128, 128
          %1329 = vsyncadd %s1320, %s1328
          %s1330 = sadd.s32 %s38, %s37
          %s1331 = smul.addr %s1330, 128
          %s1332 = scalar_lea.hbm %s11, %s1331
          %s1334 = sshll.u32 %s1323, 4
          %s1335 = int_to_ptr.vmem [resolvable:$true] %s1334
          %1337 = dma.vmem_to_hbm [thread:$0]  %s1335, 128, %s1332, %s1320
        $region96: #{tpu_custom_call.1} parent=63 // pred_fallthru
          _
      $region64: #{tpu_custom_call.1} parent=5 // pred_fallthru
        _
      %p1338 = scmp.le.s32.totalorder 2, %s28
      // Predicated region
      $region97: #{tpu_custom_call.1} parent=5 // pred_check
        %p1339 = pneg %p1338
      $region98: #{tpu_custom_call.1} parent=5 // pred_check_branch
        %1341 = sbr.rel (%p1339) target = $region100
      $region99: #{tpu_custom_call.1} parent=5 // pred_region
        %s1342 = ssub.s32 %s28, 2
        // Predicated region
        $region101: #{tpu_custom_call.1} parent=99 // pred_check
          %p1343 = pneg %p319
        $region102: #{tpu_custom_call.1} parent=99 // pred_check_branch
          %1345 = sbr.rel (%p1343) target = $region104
        $region103: #{tpu_custom_call.1} parent=99 // pred_region
          %s1346 = sand.u32 %s304, 1
          %s1347 = scalar_lea.sflag [#allocation7], %s1346
          %s1348 = sand.u32 %s304, 1
          %s1349 = smul.addr %s1348, 8
          %s1350 = scalar_lea.vmem [#allocation16], %s1349
          %1351 = dma.done %s1347, 128
        $region104: #{tpu_custom_call.1} parent=99 // pred_fallthru
          _
      $region100: #{tpu_custom_call.1} parent=5 // pred_fallthru
        _
    $region6: #{tpu_custom_call.1} parent=1 // loop_footer
      %s32 = sadd.s32 1, %s28
    $region7: #{tpu_custom_call.1} parent=1 // loop_footer_branch
      %27 = sbr.rel target = $region3
    $region8: #{tpu_custom_call.1} parent=1 // loop_exit
      _
    %1352 = vsyncpa [#allocation6], 1
    %s1353 = scalar_lea.sflag [#allocation6], 1
    %1354 = vsyncpa %s1353, 1
    %1355 = vsyncpa [#allocation9], 1
    %s1356 = scalar_lea.sflag [#allocation9], 1
    %1357 = vsyncpa %s1356, 1
    %1358 = vsyncpa [#allocation12], 1
    %1359 = vsyncpa [#allocation15], 1
    %1360 = vsyncpa [#allocation7], 1
    %s1361 = scalar_lea.sflag [#allocation7], 1
    %1362 = vsyncpa %s1361, 1

</llo_original>
